<compile_context>
chip_gen: v5e
topology: v5e:2x2
jax: 0.10.0
libtpu: 0.0.40
codegen_flags: <defaults>
</compile_context>

<pallas_src>
import re
import functools

import numpy as np
import jax
import jax.numpy as jnp
from jax.experimental import pallas as pl
from jax.experimental.pallas import tpu as pltpu

# ----------------------------- tokenization glue ------------------------------
TOKENIZER2 = re.compile("[A-Z]{2,}(?![a-z])|[A-Z][a-z]+(?=[A-Z])|[\\'\\w]+",
                        re.UNICODE | re.MULTILINE | re.DOTALL)


def word_tokenize2(text):
    return [s.lower() for s in TOKENIZER2.findall(text)]


PAD, UNK, EOS = "<pad>", "<unk>", "<eos>"


# ----------------------------- Pallas kernel ----------------------------------
# Flat layout per batch-block (block = batch_tile utterances):
#   x    : (T*TB, E)   row (t*TB + j) = embedding of token t of utterance j, bf16
#   mask : (T*TB, 1)   1.0 for real tokens, 0.0 for padding, f32
#   W_ih : (E, 8H) bf16  -- [fwd i,f,o,g | bwd i,f,o,g] column blocks
#   W_hh : (H, 4H) bf16 per direction, gate order [i,f,o,g]
#   b    : (1, 8H) f32   -- b_ih + b_hh, both directions
#   out  : (TB, 2H) f32  = [forward_final_h | backward_final_h]


def _bilstm_kernel(x_ref, m_ref, wih_ref, whh_f_ref, whh_b_ref, b_ref, out_ref,
                   *, seq_len, batch_tile):
    T, TB = seq_len, batch_tile
    H = whh_f_ref.shape[0]

    # Hoisted input projection: one large MXU matmul for both directions + one bias add.
    gates_in = jnp.dot(x_ref[...], wih_ref[...],
                       preferred_element_type=jnp.float32) + b_ref[...]   # (T*TB, 8H) f32

    m_all = m_ref[...]            # (T*TB, 1) f32
    whh_f = whh_f_ref[...]        # (H, 4H) bf16
    whh_b = whh_b_ref[...]        # (H, 4H) bf16

    def gate_math(pre, c):
        # gate order [i, f, o, g]: one sigmoid over a contiguous 3H slab + one tanh over H
        ifo = jax.nn.sigmoid(pre[:, :3 * H])
        g = jnp.tanh(pre[:, 3 * H:])
        i_g, f_g, o_g = ifo[:, :H], ifo[:, H:2 * H], ifo[:, 2 * H:]
        c_new = f_g * c + i_g * g
        h_new = o_g * jnp.tanh(c_new)
        return h_new, c_new

    z = jnp.zeros((TB, H), jnp.float32)
    h_f, c_f = z, z
    h_b, c_b = z, z

    # Fused fwd/bwd recurrence, statically unrolled (T = max_words + 1 is small).
    for s in range(T):
        rf = s * TB               # forward walks t = 0 .. T-1
        rb = (T - 1 - s) * TB     # backward walks t = T-1 .. 0

        # ---- forward direction ----
        pre_f = gates_in[rf:rf + TB, :4 * H] + jnp.dot(
            h_f.astype(jnp.bfloat16), whh_f, preferred_element_type=jnp.float32)
        hf_n, cf_n = gate_math(pre_f, c_f)
        m_f = m_all[rf:rf + TB, :]
        h_f = jnp.where(m_f > 0, hf_n, h_f)
        c_f = jnp.where(m_f > 0, cf_n, c_f)

        # ---- backward direction ----
        pre_b = gates_in[rb:rb + TB, 4 * H:] + jnp.dot(
            h_b.astype(jnp.bfloat16), whh_b, preferred_element_type=jnp.float32)
        hb_n, cb_n = gate_math(pre_b, c_b)
        m_b = m_all[rb:rb + TB, :]
        h_b = jnp.where(m_b > 0, hb_n, h_b)
        c_b = jnp.where(m_b > 0, cb_n, c_b)

    # Direct slab writes (no concatenate relayout).
    out_ref[:, :H] = h_f
    out_ref[:, H:] = h_b


def bilstm_final_states(x_flat, m_flat, wih, whh_f, whh_b, b, *, seq_len, batch_tile):
    """x_flat: (n_blk*T*TB, E) bf16, m_flat: (n_blk*T*TB, 1) f32 -> (n_blk*TB, 2H) f32."""
    rows, E = x_flat.shape
    H = whh_f.shape[0]
    blk_rows = seq_len * batch_tile
    n_blk = rows // blk_rows

    kernel = functools.partial(_bilstm_kernel, seq_len=seq_len, batch_tile=batch_tile)
    return pl.pallas_call(
        kernel,
        out_shape=jax.ShapeDtypeStruct((n_blk * batch_tile, 2 * H), jnp.float32),
        grid=(n_blk,),
        in_specs=[
            pl.BlockSpec((blk_rows, E), lambda i: (i, 0)),        # x  (per batch block)
            pl.BlockSpec((blk_rows, 1), lambda i: (i, 0)),        # mask
            pl.BlockSpec((E, 8 * H), lambda i: (0, 0)),           # W_ih (both dirs)
            pl.BlockSpec((H, 4 * H), lambda i: (0, 0)),           # W_hh fwd
            pl.BlockSpec((H, 4 * H), lambda i: (0, 0)),           # W_hh bwd
            pl.BlockSpec((1, 8 * H), lambda i: (0, 0)),           # bias (both dirs)
        ],
        out_specs=pl.BlockSpec((batch_tile, 2 * H), lambda i: (i, 0)),
        compiler_params=pltpu.CompilerParams(
            dimension_semantics=("parallel",)),                   # megacore on v7x
    )(x_flat, m_flat, wih, whh_f, whh_b, b)


@functools.partial(jax.jit, static_argnames=("seq_len", "batch_tile"))
def _embed_and_encode(idx_flat, msk_flat, embedding, wih, whh_f, whh_b, b,
                      *, seq_len, batch_tile):
    # Embedding gather stays in XLA; cast to bf16 so the Pallas DMA moves half the bytes.
    x = jnp.take(embedding, idx_flat, axis=0).astype(jnp.bfloat16)
    return bilstm_final_states(x, msk_flat, wih, whh_f, whh_b, b,
                               seq_len=seq_len, batch_tile=batch_tile)


# ----------------------------- parameter init ---------------------------------
def init_params(key, vocab_size, embed_dim, lstm_dim):
    assert lstm_dim % 2 == 0, "BidirectionalSourceEncoder requires even lstm_dim"
    H = lstm_dim // 2
    ks = jax.random.split(key, 9)
    bound = 1.0 / np.sqrt(H)

    def u(k, shape):
        return jax.random.uniform(k, shape, jnp.float32, -bound, bound)

    # Gate column order is [i, f, o, g].  (Converting torch LSTMCell weights would
    # require reordering its [i, f, g, o] columns; here weights are random anyway.)
    return dict(
        embedding=0.1 * jax.random.normal(ks[0], (vocab_size, embed_dim), jnp.float32),
        wih_f=u(ks[1], (embed_dim, 4 * H)),
        whh_f=u(ks[2], (H, 4 * H)),
        b_f=u(ks[3], (1, 4 * H)) + u(ks[4], (1, 4 * H)),   # b_ih + b_hh
        wih_b=u(ks[5], (embed_dim, 4 * H)),
        whh_b=u(ks[6], (H, 4 * H)),
        b_b=u(ks[7], (1, 4 * H)) + u(ks[8], (1, 4 * H)),
    )


# ----------------------------- module wrapper ----------------------------------
class LSTMUtteranceEmbedderPallas:
    BATCH_TILE = 8   # sublane-aligned batch tile; grid over batch blocks

    def __init__(self, params, vocab, lstm_dim, max_words, lang="en"):
        self.params = params
        self.vocab = vocab
        self.lstm_dim = lstm_dim
        self.max_words = max_words
        self.tokenize = word_tokenize2 if lang == "en" else (lambda t: t.split(" "))
        # One-time kernel weight prep: combined bf16 MXU operands, f32 bias.
        self._wih = jnp.concatenate([params["wih_f"], params["wih_b"]],
                                    axis=1).astype(jnp.bfloat16)          # (E, 8H)
        self._whh_f = params["whh_f"].astype(jnp.bfloat16)                # (H, 4H)
        self._whh_b = params["whh_b"].astype(jnp.bfloat16)                # (H, 4H)
        self._b = jnp.concatenate([params["b_f"], params["b_b"]], axis=1)  # (1, 8H) f32

    def __call__(self, utterances):
        """utterances: list[list[str]] (already-tokenized sentences)."""
        utterances = [u[: self.max_words] + [EOS] for u in utterances]
        B = len(utterances)
        T = self.max_words + 1            # static -> no recompiles per batch max length
        TB = self.BATCH_TILE
        n_blk = -(-B // TB)
        H = self.lstm_dim // 2
        del H  # (kept for readability)

        # Build token ids / mask directly in the kernel's flat (block, t, j) layout on
        # the host (numpy, cheap) so no device-side transpose is needed.
        idx = np.full((n_blk, T, TB), self.vocab[PAD], dtype=np.int32)
        msk = np.zeros((n_blk, T, TB, 1), dtype=np.float32)
        for bi, u in enumerate(utterances):
            blk, j = divmod(bi, TB)
            for t, w in enumerate(u):
                idx[blk, t, j] = self.vocab.get(w, self.vocab[UNK])
                msk[blk, t, j, 0] = 1.0

        idx_flat = jnp.asarray(idx.reshape(n_blk * T * TB))
        msk_flat = jnp.asarray(msk.reshape(n_blk * T * TB, 1))

        out = _embed_and_encode(idx_flat, msk_flat, self.params["embedding"],
                                self._wih, self._whh_f, self._whh_b, self._b,
                                seq_len=T, batch_tile=TB)   # (n_blk*TB, lstm_dim)
        return out[:B]                                       # drop padded batch rows


# ----------------------------- pure-JAX reference ------------------------------
def reference_bilstm(x_f32, mask, params):
    """x_f32: (T,B,E) f32, mask: (T,B,1) f32 -> (B, 2H).  Same math as the kernel
    (bf16 MXU operands, f32 elementwise, gate order [i,f,o,g])."""
    T, B, E = x_f32.shape
    H = params["whh_f"].shape[0]
    xb = x_f32.astype(jnp.bfloat16)

    def run(wih, whh, b, order):
        wih16 = wih.astype(jnp.bfloat16)
        whh16 = whh.astype(jnp.bfloat16)
        h = jnp.zeros((B, H), jnp.float32)
        c = jnp.zeros((B, H), jnp.float32)
        for t in order:
            pre = (jnp.dot(xb[t], wih16, preferred_element_type=jnp.float32)
                   + jnp.dot(h.astype(jnp.bfloat16), whh16,
                             preferred_element_type=jnp.float32)
                   + b)
            i = jax.nn.sigmoid(pre[:, :H])
            f = jax.nn.sigmoid(pre[:, H:2 * H])
            o = jax.nn.sigmoid(pre[:, 2 * H:3 * H])
            g = jnp.tanh(pre[:, 3 * H:])
            c_new = f * c + i * g
            h_new = o * jnp.tanh(c_new)
            m = mask[t]
            h = jnp.where(m > 0, h_new, h)
            c = jnp.where(m > 0, c_new, c)
        return h

    h_f = run(params["wih_f"], params["whh_f"], params["b_f"], range(T))
    h_b = run(params["wih_b"], params["whh_b"], params["b_b"], range(T - 1, -1, -1))
    return jnp.concatenate([h_f, h_b], axis=1)


# ----------------------------- main --------------------------------------------
if __name__ == "__main__":
    key = jax.random.PRNGKey(0)

    texts = [
        "Jeff's dog is un-American SomeTimes! BUT NOTAlways",
        "Click the submit button",
    ]
    utterances = [word_tokenize2(t) for t in texts]

    # deterministic tiny vocab
    vocab_words = [PAD, UNK, EOS]
    for u in utterances:
        for w in u:
            if w not in vocab_words:
                vocab_words.append(w)
    vocab = {w: i for i, w in enumerate(vocab_words)}

    embed_dim, lstm_dim, max_words = 32, 32, 8
    params = init_params(key, len(vocab_words), embed_dim, lstm_dim)

    embedder = LSTMUtteranceEmbedderPallas(params, vocab, lstm_dim, max_words, lang="en")
    out = embedder(utterances)
    out = jax.block_until_ready(out)

    assert out.shape == (len(utterances), lstm_dim), out.shape

    # correctness check against a pure-JAX reference of the same math
    trunc = [u[:max_words] + [EOS] for u in utterances]
    B, T = len(trunc), max_words + 1
    idx = np.full((T, B), vocab[PAD], dtype=np.int32)
    msk = np.zeros((T, B, 1), dtype=np.float32)
    for b, u in enumerate(trunc):
        for t, w in enumerate(u):
            idx[t, b] = vocab.get(w, vocab[UNK])
            msk[t, b, 0] = 1.0
    x_ref = jnp.take(params["embedding"], jnp.asarray(idx), axis=0)      # (T,B,E) f32
    ref = reference_bilstm(x_ref, jnp.asarray(msk), params)

    err = float(jnp.abs(out - ref).max())
    assert jnp.allclose(out, ref, atol=5e-3, rtol=1e-2), err
    print("KERNEL_OK")
</pallas_src>

<mosaic_0001>
module attributes {stable_mosaic.version = 11 : i64} {
  func.func @_bilstm_kernel(%arg0: i32, %arg1: memref<72x32xbf16, #tpu.memory_space<vmem>>, %arg2: memref<72x1xf32, #tpu.memory_space<vmem>>, %arg3: memref<32x128xbf16, #tpu.memory_space<vmem>>, %arg4: memref<16x64xbf16, #tpu.memory_space<vmem>>, %arg5: memref<16x64xbf16, #tpu.memory_space<vmem>>, %arg6: memref<1x128xf32, #tpu.memory_space<vmem>>, %arg7: memref<8x32xf32, #tpu.memory_space<vmem>>) attributes {dimension_semantics = [#tpu.dimension_semantics<parallel>], iteration_bounds = array<i64: 1>, scalar_prefetch = 0 : i64, scratch_operands = 0 : i64, tpu.core_type = #tpu.core_type<tc>, window_params = [{transform_indices = @transform_0, window_bounds = array<i64: 72, 32>}, {transform_indices = @transform_1, window_bounds = array<i64: 72, 1>}, {pipeline_mode = #tpu.pipeline_mode<synchronous>, transform_indices = @transform_2, window_bounds = array<i64: 32, 128>}, {pipeline_mode = #tpu.pipeline_mode<synchronous>, transform_indices = @transform_3, window_bounds = array<i64: 16, 64>}, {pipeline_mode = #tpu.pipeline_mode<synchronous>, transform_indices = @transform_4, window_bounds = array<i64: 16, 64>}, {pipeline_mode = #tpu.pipeline_mode<synchronous>, transform_indices = @transform_5, window_bounds = array<i64: 1, 128>}, {transform_indices = @transform_6, window_bounds = array<i64: 8, 32>}]} {
    %c0 = arith.constant 0 : index
    %c0_0 = arith.constant 0 : index
    %0 = vector.load %arg1[%c0, %c0_0] : memref<72x32xbf16, #tpu.memory_space<vmem>>, vector<72x32xbf16>
    %c0_1 = arith.constant 0 : index
    %c0_2 = arith.constant 0 : index
    %1 = vector.load %arg3[%c0_1, %c0_2] : memref<32x128xbf16, #tpu.memory_space<vmem>>, vector<32x128xbf16>
    %cst = arith.constant dense<0.000000e+00> : vector<72x128xf32>
    %2 = tpu.matmul %0, %1, %cst {dimension_numbers = #tpu.dot_dimension_numbers<[1], [0], [0], [1], [0, 0, 1, 1], [], []>} : vector<72x32xbf16>, vector<32x128xbf16>, vector<72x128xf32> -> vector<72x128xf32>
    %c0_3 = arith.constant 0 : index
    %c0_4 = arith.constant 0 : index
    %3 = vector.load %arg6[%c0_3, %c0_4] : memref<1x128xf32, #tpu.memory_space<vmem>>, vector<1x128xf32>
    %4 = vector.broadcast %3 : vector<1x128xf32> to vector<72x128xf32>
    %5 = arith.addf %2, %4 : vector<72x128xf32>
    %c0_5 = arith.constant 0 : index
    %c0_6 = arith.constant 0 : index
    %6 = vector.load %arg2[%c0_5, %c0_6] : memref<72x1xf32, #tpu.memory_space<vmem>>, vector<72x1xf32>
    %c0_7 = arith.constant 0 : index
    %c0_8 = arith.constant 0 : index
    %7 = vector.load %arg4[%c0_7, %c0_8] : memref<16x64xbf16, #tpu.memory_space<vmem>>, vector<16x64xbf16>
    %c0_9 = arith.constant 0 : index
    %c0_10 = arith.constant 0 : index
    %8 = vector.load %arg5[%c0_9, %c0_10] : memref<16x64xbf16, #tpu.memory_space<vmem>>, vector<16x64xbf16>
    %cst_11 = arith.constant 0.000000e+00 : f32
    %9 = vector.broadcast %cst_11 : f32 to vector<8x16xf32>
    %10 = vector.extract_strided_slice %5 {offsets = [0, 0], sizes = [8, 64], strides = [1, 1]} : vector<72x128xf32> to vector<8x64xf32>
    %11 = arith.truncf %9 : vector<8x16xf32> to vector<8x16xbf16>
    %cst_12 = arith.constant dense<0.000000e+00> : vector<8x64xf32>
    %12 = tpu.matmul %11, %7, %cst_12 {dimension_numbers = #tpu.dot_dimension_numbers<[1], [0], [0], [1], [0, 0, 1, 1], [], []>} : vector<8x16xbf16>, vector<16x64xbf16>, vector<8x64xf32> -> vector<8x64xf32>
    %13 = arith.addf %10, %12 : vector<8x64xf32>
    %14 = vector.extract_strided_slice %13 {offsets = [0, 0], sizes = [8, 48], strides = [1, 1]} : vector<8x64xf32> to vector<8x48xf32>
    %15 = arith.negf %14 : vector<8x48xf32>
    %16 = math.exp %15 : vector<8x48xf32>
    %cst_13 = arith.constant 1.000000e+00 : f32
    %17 = vector.broadcast %cst_13 : f32 to vector<8x48xf32>
    %18 = arith.addf %17, %16 : vector<8x48xf32>
    %19 = arith.divf %17, %18 : vector<8x48xf32>
    %20 = vector.extract_strided_slice %13 {offsets = [0, 48], sizes = [8, 16], strides = [1, 1]} : vector<8x64xf32> to vector<8x16xf32>
    %21 = math.tanh %20 : vector<8x16xf32>
    %22 = vector.extract_strided_slice %19 {offsets = [0, 0], sizes = [8, 16], strides = [1, 1]} : vector<8x48xf32> to vector<8x16xf32>
    %23 = vector.extract_strided_slice %19 {offsets = [0, 16], sizes = [8, 16], strides = [1, 1]} : vector<8x48xf32> to vector<8x16xf32>
    %24 = vector.extract_strided_slice %19 {offsets = [0, 32], sizes = [8, 16], strides = [1, 1]} : vector<8x48xf32> to vector<8x16xf32>
    %25 = arith.mulf %23, %9 : vector<8x16xf32>
    %26 = arith.mulf %22, %21 : vector<8x16xf32>
    %27 = arith.addf %25, %26 : vector<8x16xf32>
    %28 = math.tanh %27 : vector<8x16xf32>
    %29 = arith.mulf %24, %28 : vector<8x16xf32>
    %30 = vector.extract_strided_slice %6 {offsets = [0, 0], sizes = [8, 1], strides = [1, 1]} : vector<72x1xf32> to vector<8x1xf32>
    %cst_14 = arith.constant 0.000000e+00 : f32
    %31 = vector.broadcast %cst_14 : f32 to vector<8x1xf32>
    %32 = arith.cmpf ogt, %30, %31 : vector<8x1xf32>
    %33 = vector.shape_cast %32 : vector<8x1xi1> to vector<8x1xi1>
    %34 = vector.broadcast %33 : vector<8x1xi1> to vector<8x16xi1>
    %35 = arith.select %34, %29, %9 : vector<8x16xi1>, vector<8x16xf32>
    %cst_15 = arith.constant 0.000000e+00 : f32
    %36 = vector.broadcast %cst_15 : f32 to vector<8x1xf32>
    %37 = arith.cmpf ogt, %30, %36 : vector<8x1xf32>
    %38 = vector.shape_cast %37 : vector<8x1xi1> to vector<8x1xi1>
    %39 = vector.broadcast %38 : vector<8x1xi1> to vector<8x16xi1>
    %40 = arith.select %39, %27, %9 : vector<8x16xi1>, vector<8x16xf32>
    %41 = vector.extract_strided_slice %5 {offsets = [64, 64], sizes = [8, 64], strides = [1, 1]} : vector<72x128xf32> to vector<8x64xf32>
    %42 = arith.truncf %9 : vector<8x16xf32> to vector<8x16xbf16>
    %cst_16 = arith.constant dense<0.000000e+00> : vector<8x64xf32>
    %43 = tpu.matmul %42, %8, %cst_16 {dimension_numbers = #tpu.dot_dimension_numbers<[1], [0], [0], [1], [0, 0, 1, 1], [], []>} : vector<8x16xbf16>, vector<16x64xbf16>, vector<8x64xf32> -> vector<8x64xf32>
    %44 = arith.addf %41, %43 : vector<8x64xf32>
    %45 = vector.extract_strided_slice %44 {offsets = [0, 0], sizes = [8, 48], strides = [1, 1]} : vector<8x64xf32> to vector<8x48xf32>
    %46 = arith.negf %45 : vector<8x48xf32>
    %47 = math.exp %46 : vector<8x48xf32>
    %cst_17 = arith.constant 1.000000e+00 : f32
    %48 = vector.broadcast %cst_17 : f32 to vector<8x48xf32>
    %49 = arith.addf %48, %47 : vector<8x48xf32>
    %50 = arith.divf %48, %49 : vector<8x48xf32>
    %51 = vector.extract_strided_slice %44 {offsets = [0, 48], sizes = [8, 16], strides = [1, 1]} : vector<8x64xf32> to vector<8x16xf32>
    %52 = math.tanh %51 : vector<8x16xf32>
    %53 = vector.extract_strided_slice %50 {offsets = [0, 0], sizes = [8, 16], strides = [1, 1]} : vector<8x48xf32> to vector<8x16xf32>
    %54 = vector.extract_strided_slice %50 {offsets = [0, 16], sizes = [8, 16], strides = [1, 1]} : vector<8x48xf32> to vector<8x16xf32>
    %55 = vector.extract_strided_slice %50 {offsets = [0, 32], sizes = [8, 16], strides = [1, 1]} : vector<8x48xf32> to vector<8x16xf32>
    %56 = arith.mulf %54, %9 : vector<8x16xf32>
    %57 = arith.mulf %53, %52 : vector<8x16xf32>
    %58 = arith.addf %56, %57 : vector<8x16xf32>
    %59 = math.tanh %58 : vector<8x16xf32>
    %60 = arith.mulf %55, %59 : vector<8x16xf32>
    %61 = vector.extract_strided_slice %6 {offsets = [64, 0], sizes = [8, 1], strides = [1, 1]} : vector<72x1xf32> to vector<8x1xf32>
    %cst_18 = arith.constant 0.000000e+00 : f32
    %62 = vector.broadcast %cst_18 : f32 to vector<8x1xf32>
    %63 = arith.cmpf ogt, %61, %62 : vector<8x1xf32>
    %64 = vector.shape_cast %63 : vector<8x1xi1> to vector<8x1xi1>
    %65 = vector.broadcast %64 : vector<8x1xi1> to vector<8x16xi1>
    %66 = arith.select %65, %60, %9 : vector<8x16xi1>, vector<8x16xf32>
    %cst_19 = arith.constant 0.000000e+00 : f32
    %67 = vector.broadcast %cst_19 : f32 to vector<8x1xf32>
    %68 = arith.cmpf ogt, %61, %67 : vector<8x1xf32>
    %69 = vector.shape_cast %68 : vector<8x1xi1> to vector<8x1xi1>
    %70 = vector.broadcast %69 : vector<8x1xi1> to vector<8x16xi1>
    %71 = arith.select %70, %58, %9 : vector<8x16xi1>, vector<8x16xf32>
    %72 = vector.extract_strided_slice %5 {offsets = [8, 0], sizes = [8, 64], strides = [1, 1]} : vector<72x128xf32> to vector<8x64xf32>
    %73 = arith.truncf %35 : vector<8x16xf32> to vector<8x16xbf16>
    %cst_20 = arith.constant dense<0.000000e+00> : vector<8x64xf32>
    %74 = tpu.matmul %73, %7, %cst_20 {dimension_numbers = #tpu.dot_dimension_numbers<[1], [0], [0], [1], [0, 0, 1, 1], [], []>} : vector<8x16xbf16>, vector<16x64xbf16>, vector<8x64xf32> -> vector<8x64xf32>
    %75 = arith.addf %72, %74 : vector<8x64xf32>
    %76 = vector.extract_strided_slice %75 {offsets = [0, 0], sizes = [8, 48], strides = [1, 1]} : vector<8x64xf32> to vector<8x48xf32>
    %77 = arith.negf %76 : vector<8x48xf32>
    %78 = math.exp %77 : vector<8x48xf32>
    %cst_21 = arith.constant 1.000000e+00 : f32
    %79 = vector.broadcast %cst_21 : f32 to vector<8x48xf32>
    %80 = arith.addf %79, %78 : vector<8x48xf32>
    %81 = arith.divf %79, %80 : vector<8x48xf32>
    %82 = vector.extract_strided_slice %75 {offsets = [0, 48], sizes = [8, 16], strides = [1, 1]} : vector<8x64xf32> to vector<8x16xf32>
    %83 = math.tanh %82 : vector<8x16xf32>
    %84 = vector.extract_strided_slice %81 {offsets = [0, 0], sizes = [8, 16], strides = [1, 1]} : vector<8x48xf32> to vector<8x16xf32>
    %85 = vector.extract_strided_slice %81 {offsets = [0, 16], sizes = [8, 16], strides = [1, 1]} : vector<8x48xf32> to vector<8x16xf32>
    %86 = vector.extract_strided_slice %81 {offsets = [0, 32], sizes = [8, 16], strides = [1, 1]} : vector<8x48xf32> to vector<8x16xf32>
    %87 = arith.mulf %85, %40 : vector<8x16xf32>
    %88 = arith.mulf %84, %83 : vector<8x16xf32>
    %89 = arith.addf %87, %88 : vector<8x16xf32>
    %90 = math.tanh %89 : vector<8x16xf32>
    %91 = arith.mulf %86, %90 : vector<8x16xf32>
    %92 = vector.extract_strided_slice %6 {offsets = [8, 0], sizes = [8, 1], strides = [1, 1]} : vector<72x1xf32> to vector<8x1xf32>
    %cst_22 = arith.constant 0.000000e+00 : f32
    %93 = vector.broadcast %cst_22 : f32 to vector<8x1xf32>
    %94 = arith.cmpf ogt, %92, %93 : vector<8x1xf32>
    %95 = vector.shape_cast %94 : vector<8x1xi1> to vector<8x1xi1>
    %96 = vector.broadcast %95 : vector<8x1xi1> to vector<8x16xi1>
    %97 = arith.select %96, %91, %35 : vector<8x16xi1>, vector<8x16xf32>
    %cst_23 = arith.constant 0.000000e+00 : f32
    %98 = vector.broadcast %cst_23 : f32 to vector<8x1xf32>
    %99 = arith.cmpf ogt, %92, %98 : vector<8x1xf32>
    %100 = vector.shape_cast %99 : vector<8x1xi1> to vector<8x1xi1>
    %101 = vector.broadcast %100 : vector<8x1xi1> to vector<8x16xi1>
    %102 = arith.select %101, %89, %40 : vector<8x16xi1>, vector<8x16xf32>
    %103 = vector.extract_strided_slice %5 {offsets = [56, 64], sizes = [8, 64], strides = [1, 1]} : vector<72x128xf32> to vector<8x64xf32>
    %104 = arith.truncf %66 : vector<8x16xf32> to vector<8x16xbf16>
    %cst_24 = arith.constant dense<0.000000e+00> : vector<8x64xf32>
    %105 = tpu.matmul %104, %8, %cst_24 {dimension_numbers = #tpu.dot_dimension_numbers<[1], [0], [0], [1], [0, 0, 1, 1], [], []>} : vector<8x16xbf16>, vector<16x64xbf16>, vector<8x64xf32> -> vector<8x64xf32>
    %106 = arith.addf %103, %105 : vector<8x64xf32>
    %107 = vector.extract_strided_slice %106 {offsets = [0, 0], sizes = [8, 48], strides = [1, 1]} : vector<8x64xf32> to vector<8x48xf32>
    %108 = arith.negf %107 : vector<8x48xf32>
    %109 = math.exp %108 : vector<8x48xf32>
    %cst_25 = arith.constant 1.000000e+00 : f32
    %110 = vector.broadcast %cst_25 : f32 to vector<8x48xf32>
    %111 = arith.addf %110, %109 : vector<8x48xf32>
    %112 = arith.divf %110, %111 : vector<8x48xf32>
    %113 = vector.extract_strided_slice %106 {offsets = [0, 48], sizes = [8, 16], strides = [1, 1]} : vector<8x64xf32> to vector<8x16xf32>
    %114 = math.tanh %113 : vector<8x16xf32>
    %115 = vector.extract_strided_slice %112 {offsets = [0, 0], sizes = [8, 16], strides = [1, 1]} : vector<8x48xf32> to vector<8x16xf32>
    %116 = vector.extract_strided_slice %112 {offsets = [0, 16], sizes = [8, 16], strides = [1, 1]} : vector<8x48xf32> to vector<8x16xf32>
    %117 = vector.extract_strided_slice %112 {offsets = [0, 32], sizes = [8, 16], strides = [1, 1]} : vector<8x48xf32> to vector<8x16xf32>
    %118 = arith.mulf %116, %71 : vector<8x16xf32>
    %119 = arith.mulf %115, %114 : vector<8x16xf32>
    %120 = arith.addf %118, %119 : vector<8x16xf32>
    %121 = math.tanh %120 : vector<8x16xf32>
    %122 = arith.mulf %117, %121 : vector<8x16xf32>
    %123 = vector.extract_strided_slice %6 {offsets = [56, 0], sizes = [8, 1], strides = [1, 1]} : vector<72x1xf32> to vector<8x1xf32>
    %cst_26 = arith.constant 0.000000e+00 : f32
    %124 = vector.broadcast %cst_26 : f32 to vector<8x1xf32>
    %125 = arith.cmpf ogt, %123, %124 : vector<8x1xf32>
    %126 = vector.shape_cast %125 : vector<8x1xi1> to vector<8x1xi1>
    %127 = vector.broadcast %126 : vector<8x1xi1> to vector<8x16xi1>
    %128 = arith.select %127, %122, %66 : vector<8x16xi1>, vector<8x16xf32>
    %cst_27 = arith.constant 0.000000e+00 : f32
    %129 = vector.broadcast %cst_27 : f32 to vector<8x1xf32>
    %130 = arith.cmpf ogt, %123, %129 : vector<8x1xf32>
    %131 = vector.shape_cast %130 : vector<8x1xi1> to vector<8x1xi1>
    %132 = vector.broadcast %131 : vector<8x1xi1> to vector<8x16xi1>
    %133 = arith.select %132, %120, %71 : vector<8x16xi1>, vector<8x16xf32>
    %134 = vector.extract_strided_slice %5 {offsets = [16, 0], sizes = [8, 64], strides = [1, 1]} : vector<72x128xf32> to vector<8x64xf32>
    %135 = arith.truncf %97 : vector<8x16xf32> to vector<8x16xbf16>
    %cst_28 = arith.constant dense<0.000000e+00> : vector<8x64xf32>
    %136 = tpu.matmul %135, %7, %cst_28 {dimension_numbers = #tpu.dot_dimension_numbers<[1], [0], [0], [1], [0, 0, 1, 1], [], []>} : vector<8x16xbf16>, vector<16x64xbf16>, vector<8x64xf32> -> vector<8x64xf32>
    %137 = arith.addf %134, %136 : vector<8x64xf32>
    %138 = vector.extract_strided_slice %137 {offsets = [0, 0], sizes = [8, 48], strides = [1, 1]} : vector<8x64xf32> to vector<8x48xf32>
    %139 = arith.negf %138 : vector<8x48xf32>
    %140 = math.exp %139 : vector<8x48xf32>
    %cst_29 = arith.constant 1.000000e+00 : f32
    %141 = vector.broadcast %cst_29 : f32 to vector<8x48xf32>
    %142 = arith.addf %141, %140 : vector<8x48xf32>
    %143 = arith.divf %141, %142 : vector<8x48xf32>
    %144 = vector.extract_strided_slice %137 {offsets = [0, 48], sizes = [8, 16], strides = [1, 1]} : vector<8x64xf32> to vector<8x16xf32>
    %145 = math.tanh %144 : vector<8x16xf32>
    %146 = vector.extract_strided_slice %143 {offsets = [0, 0], sizes = [8, 16], strides = [1, 1]} : vector<8x48xf32> to vector<8x16xf32>
    %147 = vector.extract_strided_slice %143 {offsets = [0, 16], sizes = [8, 16], strides = [1, 1]} : vector<8x48xf32> to vector<8x16xf32>
    %148 = vector.extract_strided_slice %143 {offsets = [0, 32], sizes = [8, 16], strides = [1, 1]} : vector<8x48xf32> to vector<8x16xf32>
    %149 = arith.mulf %147, %102 : vector<8x16xf32>
    %150 = arith.mulf %146, %145 : vector<8x16xf32>
    %151 = arith.addf %149, %150 : vector<8x16xf32>
    %152 = math.tanh %151 : vector<8x16xf32>
    %153 = arith.mulf %148, %152 : vector<8x16xf32>
    %154 = vector.extract_strided_slice %6 {offsets = [16, 0], sizes = [8, 1], strides = [1, 1]} : vector<72x1xf32> to vector<8x1xf32>
    %cst_30 = arith.constant 0.000000e+00 : f32
    %155 = vector.broadcast %cst_30 : f32 to vector<8x1xf32>
    %156 = arith.cmpf ogt, %154, %155 : vector<8x1xf32>
    %157 = vector.shape_cast %156 : vector<8x1xi1> to vector<8x1xi1>
    %158 = vector.broadcast %157 : vector<8x1xi1> to vector<8x16xi1>
    %159 = arith.select %158, %153, %97 : vector<8x16xi1>, vector<8x16xf32>
    %cst_31 = arith.constant 0.000000e+00 : f32
    %160 = vector.broadcast %cst_31 : f32 to vector<8x1xf32>
    %161 = arith.cmpf ogt, %154, %160 : vector<8x1xf32>
    %162 = vector.shape_cast %161 : vector<8x1xi1> to vector<8x1xi1>
    %163 = vector.broadcast %162 : vector<8x1xi1> to vector<8x16xi1>
    %164 = arith.select %163, %151, %102 : vector<8x16xi1>, vector<8x16xf32>
    %165 = vector.extract_strided_slice %5 {offsets = [48, 64], sizes = [8, 64], strides = [1, 1]} : vector<72x128xf32> to vector<8x64xf32>
    %166 = arith.truncf %128 : vector<8x16xf32> to vector<8x16xbf16>
    %cst_32 = arith.constant dense<0.000000e+00> : vector<8x64xf32>
    %167 = tpu.matmul %166, %8, %cst_32 {dimension_numbers = #tpu.dot_dimension_numbers<[1], [0], [0], [1], [0, 0, 1, 1], [], []>} : vector<8x16xbf16>, vector<16x64xbf16>, vector<8x64xf32> -> vector<8x64xf32>
    %168 = arith.addf %165, %167 : vector<8x64xf32>
    %169 = vector.extract_strided_slice %168 {offsets = [0, 0], sizes = [8, 48], strides = [1, 1]} : vector<8x64xf32> to vector<8x48xf32>
    %170 = arith.negf %169 : vector<8x48xf32>
    %171 = math.exp %170 : vector<8x48xf32>
    %cst_33 = arith.constant 1.000000e+00 : f32
    %172 = vector.broadcast %cst_33 : f32 to vector<8x48xf32>
    %173 = arith.addf %172, %171 : vector<8x48xf32>
    %174 = arith.divf %172, %173 : vector<8x48xf32>
    %175 = vector.extract_strided_slice %168 {offsets = [0, 48], sizes = [8, 16], strides = [1, 1]} : vector<8x64xf32> to vector<8x16xf32>
    %176 = math.tanh %175 : vector<8x16xf32>
    %177 = vector.extract_strided_slice %174 {offsets = [0, 0], sizes = [8, 16], strides = [1, 1]} : vector<8x48xf32> to vector<8x16xf32>
    %178 = vector.extract_strided_slice %174 {offsets = [0, 16], sizes = [8, 16], strides = [1, 1]} : vector<8x48xf32> to vector<8x16xf32>
    %179 = vector.extract_strided_slice %174 {offsets = [0, 32], sizes = [8, 16], strides = [1, 1]} : vector<8x48xf32> to vector<8x16xf32>
    %180 = arith.mulf %178, %133 : vector<8x16xf32>
    %181 = arith.mulf %177, %176 : vector<8x16xf32>
    %182 = arith.addf %180, %181 : vector<8x16xf32>
    %183 = math.tanh %182 : vector<8x16xf32>
    %184 = arith.mulf %179, %183 : vector<8x16xf32>
    %185 = vector.extract_strided_slice %6 {offsets = [48, 0], sizes = [8, 1], strides = [1, 1]} : vector<72x1xf32> to vector<8x1xf32>
    %cst_34 = arith.constant 0.000000e+00 : f32
    %186 = vector.broadcast %cst_34 : f32 to vector<8x1xf32>
    %187 = arith.cmpf ogt, %185, %186 : vector<8x1xf32>
    %188 = vector.shape_cast %187 : vector<8x1xi1> to vector<8x1xi1>
    %189 = vector.broadcast %188 : vector<8x1xi1> to vector<8x16xi1>
    %190 = arith.select %189, %184, %128 : vector<8x16xi1>, vector<8x16xf32>
    %cst_35 = arith.constant 0.000000e+00 : f32
    %191 = vector.broadcast %cst_35 : f32 to vector<8x1xf32>
    %192 = arith.cmpf ogt, %185, %191 : vector<8x1xf32>
    %193 = vector.shape_cast %192 : vector<8x1xi1> to vector<8x1xi1>
    %194 = vector.broadcast %193 : vector<8x1xi1> to vector<8x16xi1>
    %195 = arith.select %194, %182, %133 : vector<8x16xi1>, vector<8x16xf32>
    %196 = vector.extract_strided_slice %5 {offsets = [24, 0], sizes = [8, 64], strides = [1, 1]} : vector<72x128xf32> to vector<8x64xf32>
    %197 = arith.truncf %159 : vector<8x16xf32> to vector<8x16xbf16>
    %cst_36 = arith.constant dense<0.000000e+00> : vector<8x64xf32>
    %198 = tpu.matmul %197, %7, %cst_36 {dimension_numbers = #tpu.dot_dimension_numbers<[1], [0], [0], [1], [0, 0, 1, 1], [], []>} : vector<8x16xbf16>, vector<16x64xbf16>, vector<8x64xf32> -> vector<8x64xf32>
    %199 = arith.addf %196, %198 : vector<8x64xf32>
    %200 = vector.extract_strided_slice %199 {offsets = [0, 0], sizes = [8, 48], strides = [1, 1]} : vector<8x64xf32> to vector<8x48xf32>
    %201 = arith.negf %200 : vector<8x48xf32>
    %202 = math.exp %201 : vector<8x48xf32>
    %cst_37 = arith.constant 1.000000e+00 : f32
    %203 = vector.broadcast %cst_37 : f32 to vector<8x48xf32>
    %204 = arith.addf %203, %202 : vector<8x48xf32>
    %205 = arith.divf %203, %204 : vector<8x48xf32>
    %206 = vector.extract_strided_slice %199 {offsets = [0, 48], sizes = [8, 16], strides = [1, 1]} : vector<8x64xf32> to vector<8x16xf32>
    %207 = math.tanh %206 : vector<8x16xf32>
    %208 = vector.extract_strided_slice %205 {offsets = [0, 0], sizes = [8, 16], strides = [1, 1]} : vector<8x48xf32> to vector<8x16xf32>
    %209 = vector.extract_strided_slice %205 {offsets = [0, 16], sizes = [8, 16], strides = [1, 1]} : vector<8x48xf32> to vector<8x16xf32>
    %210 = vector.extract_strided_slice %205 {offsets = [0, 32], sizes = [8, 16], strides = [1, 1]} : vector<8x48xf32> to vector<8x16xf32>
    %211 = arith.mulf %209, %164 : vector<8x16xf32>
    %212 = arith.mulf %208, %207 : vector<8x16xf32>
    %213 = arith.addf %211, %212 : vector<8x16xf32>
    %214 = math.tanh %213 : vector<8x16xf32>
    %215 = arith.mulf %210, %214 : vector<8x16xf32>
    %216 = vector.extract_strided_slice %6 {offsets = [24, 0], sizes = [8, 1], strides = [1, 1]} : vector<72x1xf32> to vector<8x1xf32>
    %cst_38 = arith.constant 0.000000e+00 : f32
    %217 = vector.broadcast %cst_38 : f32 to vector<8x1xf32>
    %218 = arith.cmpf ogt, %216, %217 : vector<8x1xf32>
    %219 = vector.shape_cast %218 : vector<8x1xi1> to vector<8x1xi1>
    %220 = vector.broadcast %219 : vector<8x1xi1> to vector<8x16xi1>
    %221 = arith.select %220, %215, %159 : vector<8x16xi1>, vector<8x16xf32>
    %cst_39 = arith.constant 0.000000e+00 : f32
    %222 = vector.broadcast %cst_39 : f32 to vector<8x1xf32>
    %223 = arith.cmpf ogt, %216, %222 : vector<8x1xf32>
    %224 = vector.shape_cast %223 : vector<8x1xi1> to vector<8x1xi1>
    %225 = vector.broadcast %224 : vector<8x1xi1> to vector<8x16xi1>
    %226 = arith.select %225, %213, %164 : vector<8x16xi1>, vector<8x16xf32>
    %227 = vector.extract_strided_slice %5 {offsets = [40, 64], sizes = [8, 64], strides = [1, 1]} : vector<72x128xf32> to vector<8x64xf32>
    %228 = arith.truncf %190 : vector<8x16xf32> to vector<8x16xbf16>
    %cst_40 = arith.constant dense<0.000000e+00> : vector<8x64xf32>
    %229 = tpu.matmul %228, %8, %cst_40 {dimension_numbers = #tpu.dot_dimension_numbers<[1], [0], [0], [1], [0, 0, 1, 1], [], []>} : vector<8x16xbf16>, vector<16x64xbf16>, vector<8x64xf32> -> vector<8x64xf32>
    %230 = arith.addf %227, %229 : vector<8x64xf32>
    %231 = vector.extract_strided_slice %230 {offsets = [0, 0], sizes = [8, 48], strides = [1, 1]} : vector<8x64xf32> to vector<8x48xf32>
    %232 = arith.negf %231 : vector<8x48xf32>
    %233 = math.exp %232 : vector<8x48xf32>
    %cst_41 = arith.constant 1.000000e+00 : f32
    %234 = vector.broadcast %cst_41 : f32 to vector<8x48xf32>
    %235 = arith.addf %234, %233 : vector<8x48xf32>
    %236 = arith.divf %234, %235 : vector<8x48xf32>
    %237 = vector.extract_strided_slice %230 {offsets = [0, 48], sizes = [8, 16], strides = [1, 1]} : vector<8x64xf32> to vector<8x16xf32>
    %238 = math.tanh %237 : vector<8x16xf32>
    %239 = vector.extract_strided_slice %236 {offsets = [0, 0], sizes = [8, 16], strides = [1, 1]} : vector<8x48xf32> to vector<8x16xf32>
    %240 = vector.extract_strided_slice %236 {offsets = [0, 16], sizes = [8, 16], strides = [1, 1]} : vector<8x48xf32> to vector<8x16xf32>
    %241 = vector.extract_strided_slice %236 {offsets = [0, 32], sizes = [8, 16], strides = [1, 1]} : vector<8x48xf32> to vector<8x16xf32>
    %242 = arith.mulf %240, %195 : vector<8x16xf32>
    %243 = arith.mulf %239, %238 : vector<8x16xf32>
    %244 = arith.addf %242, %243 : vector<8x16xf32>
    %245 = math.tanh %244 : vector<8x16xf32>
    %246 = arith.mulf %241, %245 : vector<8x16xf32>
    %247 = vector.extract_strided_slice %6 {offsets = [40, 0], sizes = [8, 1], strides = [1, 1]} : vector<72x1xf32> to vector<8x1xf32>
    %cst_42 = arith.constant 0.000000e+00 : f32
    %248 = vector.broadcast %cst_42 : f32 to vector<8x1xf32>
    %249 = arith.cmpf ogt, %247, %248 : vector<8x1xf32>
    %250 = vector.shape_cast %249 : vector<8x1xi1> to vector<8x1xi1>
    %251 = vector.broadcast %250 : vector<8x1xi1> to vector<8x16xi1>
    %252 = arith.select %251, %246, %190 : vector<8x16xi1>, vector<8x16xf32>
    %cst_43 = arith.constant 0.000000e+00 : f32
    %253 = vector.broadcast %cst_43 : f32 to vector<8x1xf32>
    %254 = arith.cmpf ogt, %247, %253 : vector<8x1xf32>
    %255 = vector.shape_cast %254 : vector<8x1xi1> to vector<8x1xi1>
    %256 = vector.broadcast %255 : vector<8x1xi1> to vector<8x16xi1>
    %257 = arith.select %256, %244, %195 : vector<8x16xi1>, vector<8x16xf32>
    %258 = vector.extract_strided_slice %5 {offsets = [32, 0], sizes = [8, 64], strides = [1, 1]} : vector<72x128xf32> to vector<8x64xf32>
    %259 = arith.truncf %221 : vector<8x16xf32> to vector<8x16xbf16>
    %cst_44 = arith.constant dense<0.000000e+00> : vector<8x64xf32>
    %260 = tpu.matmul %259, %7, %cst_44 {dimension_numbers = #tpu.dot_dimension_numbers<[1], [0], [0], [1], [0, 0, 1, 1], [], []>} : vector<8x16xbf16>, vector<16x64xbf16>, vector<8x64xf32> -> vector<8x64xf32>
    %261 = arith.addf %258, %260 : vector<8x64xf32>
    %262 = vector.extract_strided_slice %261 {offsets = [0, 0], sizes = [8, 48], strides = [1, 1]} : vector<8x64xf32> to vector<8x48xf32>
    %263 = arith.negf %262 : vector<8x48xf32>
    %264 = math.exp %263 : vector<8x48xf32>
    %cst_45 = arith.constant 1.000000e+00 : f32
    %265 = vector.broadcast %cst_45 : f32 to vector<8x48xf32>
    %266 = arith.addf %265, %264 : vector<8x48xf32>
    %267 = arith.divf %265, %266 : vector<8x48xf32>
    %268 = vector.extract_strided_slice %261 {offsets = [0, 48], sizes = [8, 16], strides = [1, 1]} : vector<8x64xf32> to vector<8x16xf32>
    %269 = math.tanh %268 : vector<8x16xf32>
    %270 = vector.extract_strided_slice %267 {offsets = [0, 0], sizes = [8, 16], strides = [1, 1]} : vector<8x48xf32> to vector<8x16xf32>
    %271 = vector.extract_strided_slice %267 {offsets = [0, 16], sizes = [8, 16], strides = [1, 1]} : vector<8x48xf32> to vector<8x16xf32>
    %272 = vector.extract_strided_slice %267 {offsets = [0, 32], sizes = [8, 16], strides = [1, 1]} : vector<8x48xf32> to vector<8x16xf32>
    %273 = arith.mulf %271, %226 : vector<8x16xf32>
    %274 = arith.mulf %270, %269 : vector<8x16xf32>
    %275 = arith.addf %273, %274 : vector<8x16xf32>
    %276 = math.tanh %275 : vector<8x16xf32>
    %277 = arith.mulf %272, %276 : vector<8x16xf32>
    %278 = vector.extract_strided_slice %6 {offsets = [32, 0], sizes = [8, 1], strides = [1, 1]} : vector<72x1xf32> to vector<8x1xf32>
    %cst_46 = arith.constant 0.000000e+00 : f32
    %279 = vector.broadcast %cst_46 : f32 to vector<8x1xf32>
    %280 = arith.cmpf ogt, %278, %279 : vector<8x1xf32>
    %281 = vector.shape_cast %280 : vector<8x1xi1> to vector<8x1xi1>
    %282 = vector.broadcast %281 : vector<8x1xi1> to vector<8x16xi1>
    %283 = arith.select %282, %277, %221 : vector<8x16xi1>, vector<8x16xf32>
    %cst_47 = arith.constant 0.000000e+00 : f32
    %284 = vector.broadcast %cst_47 : f32 to vector<8x1xf32>
    %285 = arith.cmpf ogt, %278, %284 : vector<8x1xf32>
    %286 = vector.shape_cast %285 : vector<8x1xi1> to vector<8x1xi1>
    %287 = vector.broadcast %286 : vector<8x1xi1> to vector<8x16xi1>
    %288 = arith.select %287, %275, %226 : vector<8x16xi1>, vector<8x16xf32>
    %289 = vector.extract_strided_slice %5 {offsets = [32, 64], sizes = [8, 64], strides = [1, 1]} : vector<72x128xf32> to vector<8x64xf32>
    %290 = arith.truncf %252 : vector<8x16xf32> to vector<8x16xbf16>
    %cst_48 = arith.constant dense<0.000000e+00> : vector<8x64xf32>
    %291 = tpu.matmul %290, %8, %cst_48 {dimension_numbers = #tpu.dot_dimension_numbers<[1], [0], [0], [1], [0, 0, 1, 1], [], []>} : vector<8x16xbf16>, vector<16x64xbf16>, vector<8x64xf32> -> vector<8x64xf32>
    %292 = arith.addf %289, %291 : vector<8x64xf32>
    %293 = vector.extract_strided_slice %292 {offsets = [0, 0], sizes = [8, 48], strides = [1, 1]} : vector<8x64xf32> to vector<8x48xf32>
    %294 = arith.negf %293 : vector<8x48xf32>
    %295 = math.exp %294 : vector<8x48xf32>
    %cst_49 = arith.constant 1.000000e+00 : f32
    %296 = vector.broadcast %cst_49 : f32 to vector<8x48xf32>
    %297 = arith.addf %296, %295 : vector<8x48xf32>
    %298 = arith.divf %296, %297 : vector<8x48xf32>
    %299 = vector.extract_strided_slice %292 {offsets = [0, 48], sizes = [8, 16], strides = [1, 1]} : vector<8x64xf32> to vector<8x16xf32>
    %300 = math.tanh %299 : vector<8x16xf32>
    %301 = vector.extract_strided_slice %298 {offsets = [0, 0], sizes = [8, 16], strides = [1, 1]} : vector<8x48xf32> to vector<8x16xf32>
    %302 = vector.extract_strided_slice %298 {offsets = [0, 16], sizes = [8, 16], strides = [1, 1]} : vector<8x48xf32> to vector<8x16xf32>
    %303 = vector.extract_strided_slice %298 {offsets = [0, 32], sizes = [8, 16], strides = [1, 1]} : vector<8x48xf32> to vector<8x16xf32>
    %304 = arith.mulf %302, %257 : vector<8x16xf32>
    %305 = arith.mulf %301, %300 : vector<8x16xf32>
    %306 = arith.addf %304, %305 : vector<8x16xf32>
    %307 = math.tanh %306 : vector<8x16xf32>
    %308 = arith.mulf %303, %307 : vector<8x16xf32>
    %309 = vector.extract_strided_slice %6 {offsets = [32, 0], sizes = [8, 1], strides = [1, 1]} : vector<72x1xf32> to vector<8x1xf32>
    %cst_50 = arith.constant 0.000000e+00 : f32
    %310 = vector.broadcast %cst_50 : f32 to vector<8x1xf32>
    %311 = arith.cmpf ogt, %309, %310 : vector<8x1xf32>
    %312 = vector.shape_cast %311 : vector<8x1xi1> to vector<8x1xi1>
    %313 = vector.broadcast %312 : vector<8x1xi1> to vector<8x16xi1>
    %314 = arith.select %313, %308, %252 : vector<8x16xi1>, vector<8x16xf32>
    %cst_51 = arith.constant 0.000000e+00 : f32
    %315 = vector.broadcast %cst_51 : f32 to vector<8x1xf32>
    %316 = arith.cmpf ogt, %309, %315 : vector<8x1xf32>
    %317 = vector.shape_cast %316 : vector<8x1xi1> to vector<8x1xi1>
    %318 = vector.broadcast %317 : vector<8x1xi1> to vector<8x16xi1>
    %319 = arith.select %318, %306, %257 : vector<8x16xi1>, vector<8x16xf32>
    %320 = vector.extract_strided_slice %5 {offsets = [40, 0], sizes = [8, 64], strides = [1, 1]} : vector<72x128xf32> to vector<8x64xf32>
    %321 = arith.truncf %283 : vector<8x16xf32> to vector<8x16xbf16>
    %cst_52 = arith.constant dense<0.000000e+00> : vector<8x64xf32>
    %322 = tpu.matmul %321, %7, %cst_52 {dimension_numbers = #tpu.dot_dimension_numbers<[1], [0], [0], [1], [0, 0, 1, 1], [], []>} : vector<8x16xbf16>, vector<16x64xbf16>, vector<8x64xf32> -> vector<8x64xf32>
    %323 = arith.addf %320, %322 : vector<8x64xf32>
    %324 = vector.extract_strided_slice %323 {offsets = [0, 0], sizes = [8, 48], strides = [1, 1]} : vector<8x64xf32> to vector<8x48xf32>
    %325 = arith.negf %324 : vector<8x48xf32>
    %326 = math.exp %325 : vector<8x48xf32>
    %cst_53 = arith.constant 1.000000e+00 : f32
    %327 = vector.broadcast %cst_53 : f32 to vector<8x48xf32>
    %328 = arith.addf %327, %326 : vector<8x48xf32>
    %329 = arith.divf %327, %328 : vector<8x48xf32>
    %330 = vector.extract_strided_slice %323 {offsets = [0, 48], sizes = [8, 16], strides = [1, 1]} : vector<8x64xf32> to vector<8x16xf32>
    %331 = math.tanh %330 : vector<8x16xf32>
    %332 = vector.extract_strided_slice %329 {offsets = [0, 0], sizes = [8, 16], strides = [1, 1]} : vector<8x48xf32> to vector<8x16xf32>
    %333 = vector.extract_strided_slice %329 {offsets = [0, 16], sizes = [8, 16], strides = [1, 1]} : vector<8x48xf32> to vector<8x16xf32>
    %334 = vector.extract_strided_slice %329 {offsets = [0, 32], sizes = [8, 16], strides = [1, 1]} : vector<8x48xf32> to vector<8x16xf32>
    %335 = arith.mulf %333, %288 : vector<8x16xf32>
    %336 = arith.mulf %332, %331 : vector<8x16xf32>
    %337 = arith.addf %335, %336 : vector<8x16xf32>
    %338 = math.tanh %337 : vector<8x16xf32>
    %339 = arith.mulf %334, %338 : vector<8x16xf32>
    %340 = vector.extract_strided_slice %6 {offsets = [40, 0], sizes = [8, 1], strides = [1, 1]} : vector<72x1xf32> to vector<8x1xf32>
    %cst_54 = arith.constant 0.000000e+00 : f32
    %341 = vector.broadcast %cst_54 : f32 to vector<8x1xf32>
    %342 = arith.cmpf ogt, %340, %341 : vector<8x1xf32>
    %343 = vector.shape_cast %342 : vector<8x1xi1> to vector<8x1xi1>
    %344 = vector.broadcast %343 : vector<8x1xi1> to vector<8x16xi1>
    %345 = arith.select %344, %339, %283 : vector<8x16xi1>, vector<8x16xf32>
    %cst_55 = arith.constant 0.000000e+00 : f32
    %346 = vector.broadcast %cst_55 : f32 to vector<8x1xf32>
    %347 = arith.cmpf ogt, %340, %346 : vector<8x1xf32>
    %348 = vector.shape_cast %347 : vector<8x1xi1> to vector<8x1xi1>
    %349 = vector.broadcast %348 : vector<8x1xi1> to vector<8x16xi1>
    %350 = arith.select %349, %337, %288 : vector<8x16xi1>, vector<8x16xf32>
    %351 = vector.extract_strided_slice %5 {offsets = [24, 64], sizes = [8, 64], strides = [1, 1]} : vector<72x128xf32> to vector<8x64xf32>
    %352 = arith.truncf %314 : vector<8x16xf32> to vector<8x16xbf16>
    %cst_56 = arith.constant dense<0.000000e+00> : vector<8x64xf32>
    %353 = tpu.matmul %352, %8, %cst_56 {dimension_numbers = #tpu.dot_dimension_numbers<[1], [0], [0], [1], [0, 0, 1, 1], [], []>} : vector<8x16xbf16>, vector<16x64xbf16>, vector<8x64xf32> -> vector<8x64xf32>
    %354 = arith.addf %351, %353 : vector<8x64xf32>
    %355 = vector.extract_strided_slice %354 {offsets = [0, 0], sizes = [8, 48], strides = [1, 1]} : vector<8x64xf32> to vector<8x48xf32>
    %356 = arith.negf %355 : vector<8x48xf32>
    %357 = math.exp %356 : vector<8x48xf32>
    %cst_57 = arith.constant 1.000000e+00 : f32
    %358 = vector.broadcast %cst_57 : f32 to vector<8x48xf32>
    %359 = arith.addf %358, %357 : vector<8x48xf32>
    %360 = arith.divf %358, %359 : vector<8x48xf32>
    %361 = vector.extract_strided_slice %354 {offsets = [0, 48], sizes = [8, 16], strides = [1, 1]} : vector<8x64xf32> to vector<8x16xf32>
    %362 = math.tanh %361 : vector<8x16xf32>
    %363 = vector.extract_strided_slice %360 {offsets = [0, 0], sizes = [8, 16], strides = [1, 1]} : vector<8x48xf32> to vector<8x16xf32>
    %364 = vector.extract_strided_slice %360 {offsets = [0, 16], sizes = [8, 16], strides = [1, 1]} : vector<8x48xf32> to vector<8x16xf32>
    %365 = vector.extract_strided_slice %360 {offsets = [0, 32], sizes = [8, 16], strides = [1, 1]} : vector<8x48xf32> to vector<8x16xf32>
    %366 = arith.mulf %364, %319 : vector<8x16xf32>
    %367 = arith.mulf %363, %362 : vector<8x16xf32>
    %368 = arith.addf %366, %367 : vector<8x16xf32>
    %369 = math.tanh %368 : vector<8x16xf32>
    %370 = arith.mulf %365, %369 : vector<8x16xf32>
    %371 = vector.extract_strided_slice %6 {offsets = [24, 0], sizes = [8, 1], strides = [1, 1]} : vector<72x1xf32> to vector<8x1xf32>
    %cst_58 = arith.constant 0.000000e+00 : f32
    %372 = vector.broadcast %cst_58 : f32 to vector<8x1xf32>
    %373 = arith.cmpf ogt, %371, %372 : vector<8x1xf32>
    %374 = vector.shape_cast %373 : vector<8x1xi1> to vector<8x1xi1>
    %375 = vector.broadcast %374 : vector<8x1xi1> to vector<8x16xi1>
    %376 = arith.select %375, %370, %314 : vector<8x16xi1>, vector<8x16xf32>
    %cst_59 = arith.constant 0.000000e+00 : f32
    %377 = vector.broadcast %cst_59 : f32 to vector<8x1xf32>
    %378 = arith.cmpf ogt, %371, %377 : vector<8x1xf32>
    %379 = vector.shape_cast %378 : vector<8x1xi1> to vector<8x1xi1>
    %380 = vector.broadcast %379 : vector<8x1xi1> to vector<8x16xi1>
    %381 = arith.select %380, %368, %319 : vector<8x16xi1>, vector<8x16xf32>
    %382 = vector.extract_strided_slice %5 {offsets = [48, 0], sizes = [8, 64], strides = [1, 1]} : vector<72x128xf32> to vector<8x64xf32>
    %383 = arith.truncf %345 : vector<8x16xf32> to vector<8x16xbf16>
    %cst_60 = arith.constant dense<0.000000e+00> : vector<8x64xf32>
    %384 = tpu.matmul %383, %7, %cst_60 {dimension_numbers = #tpu.dot_dimension_numbers<[1], [0], [0], [1], [0, 0, 1, 1], [], []>} : vector<8x16xbf16>, vector<16x64xbf16>, vector<8x64xf32> -> vector<8x64xf32>
    %385 = arith.addf %382, %384 : vector<8x64xf32>
    %386 = vector.extract_strided_slice %385 {offsets = [0, 0], sizes = [8, 48], strides = [1, 1]} : vector<8x64xf32> to vector<8x48xf32>
    %387 = arith.negf %386 : vector<8x48xf32>
    %388 = math.exp %387 : vector<8x48xf32>
    %cst_61 = arith.constant 1.000000e+00 : f32
    %389 = vector.broadcast %cst_61 : f32 to vector<8x48xf32>
    %390 = arith.addf %389, %388 : vector<8x48xf32>
    %391 = arith.divf %389, %390 : vector<8x48xf32>
    %392 = vector.extract_strided_slice %385 {offsets = [0, 48], sizes = [8, 16], strides = [1, 1]} : vector<8x64xf32> to vector<8x16xf32>
    %393 = math.tanh %392 : vector<8x16xf32>
    %394 = vector.extract_strided_slice %391 {offsets = [0, 0], sizes = [8, 16], strides = [1, 1]} : vector<8x48xf32> to vector<8x16xf32>
    %395 = vector.extract_strided_slice %391 {offsets = [0, 16], sizes = [8, 16], strides = [1, 1]} : vector<8x48xf32> to vector<8x16xf32>
    %396 = vector.extract_strided_slice %391 {offsets = [0, 32], sizes = [8, 16], strides = [1, 1]} : vector<8x48xf32> to vector<8x16xf32>
    %397 = arith.mulf %395, %350 : vector<8x16xf32>
    %398 = arith.mulf %394, %393 : vector<8x16xf32>
    %399 = arith.addf %397, %398 : vector<8x16xf32>
    %400 = math.tanh %399 : vector<8x16xf32>
    %401 = arith.mulf %396, %400 : vector<8x16xf32>
    %402 = vector.extract_strided_slice %6 {offsets = [48, 0], sizes = [8, 1], strides = [1, 1]} : vector<72x1xf32> to vector<8x1xf32>
    %cst_62 = arith.constant 0.000000e+00 : f32
    %403 = vector.broadcast %cst_62 : f32 to vector<8x1xf32>
    %404 = arith.cmpf ogt, %402, %403 : vector<8x1xf32>
    %405 = vector.shape_cast %404 : vector<8x1xi1> to vector<8x1xi1>
    %406 = vector.broadcast %405 : vector<8x1xi1> to vector<8x16xi1>
    %407 = arith.select %406, %401, %345 : vector<8x16xi1>, vector<8x16xf32>
    %cst_63 = arith.constant 0.000000e+00 : f32
    %408 = vector.broadcast %cst_63 : f32 to vector<8x1xf32>
    %409 = arith.cmpf ogt, %402, %408 : vector<8x1xf32>
    %410 = vector.shape_cast %409 : vector<8x1xi1> to vector<8x1xi1>
    %411 = vector.broadcast %410 : vector<8x1xi1> to vector<8x16xi1>
    %412 = arith.select %411, %399, %350 : vector<8x16xi1>, vector<8x16xf32>
    %413 = vector.extract_strided_slice %5 {offsets = [16, 64], sizes = [8, 64], strides = [1, 1]} : vector<72x128xf32> to vector<8x64xf32>
    %414 = arith.truncf %376 : vector<8x16xf32> to vector<8x16xbf16>
    %cst_64 = arith.constant dense<0.000000e+00> : vector<8x64xf32>
    %415 = tpu.matmul %414, %8, %cst_64 {dimension_numbers = #tpu.dot_dimension_numbers<[1], [0], [0], [1], [0, 0, 1, 1], [], []>} : vector<8x16xbf16>, vector<16x64xbf16>, vector<8x64xf32> -> vector<8x64xf32>
    %416 = arith.addf %413, %415 : vector<8x64xf32>
    %417 = vector.extract_strided_slice %416 {offsets = [0, 0], sizes = [8, 48], strides = [1, 1]} : vector<8x64xf32> to vector<8x48xf32>
    %418 = arith.negf %417 : vector<8x48xf32>
    %419 = math.exp %418 : vector<8x48xf32>
    %cst_65 = arith.constant 1.000000e+00 : f32
    %420 = vector.broadcast %cst_65 : f32 to vector<8x48xf32>
    %421 = arith.addf %420, %419 : vector<8x48xf32>
    %422 = arith.divf %420, %421 : vector<8x48xf32>
    %423 = vector.extract_strided_slice %416 {offsets = [0, 48], sizes = [8, 16], strides = [1, 1]} : vector<8x64xf32> to vector<8x16xf32>
    %424 = math.tanh %423 : vector<8x16xf32>
    %425 = vector.extract_strided_slice %422 {offsets = [0, 0], sizes = [8, 16], strides = [1, 1]} : vector<8x48xf32> to vector<8x16xf32>
    %426 = vector.extract_strided_slice %422 {offsets = [0, 16], sizes = [8, 16], strides = [1, 1]} : vector<8x48xf32> to vector<8x16xf32>
    %427 = vector.extract_strided_slice %422 {offsets = [0, 32], sizes = [8, 16], strides = [1, 1]} : vector<8x48xf32> to vector<8x16xf32>
    %428 = arith.mulf %426, %381 : vector<8x16xf32>
    %429 = arith.mulf %425, %424 : vector<8x16xf32>
    %430 = arith.addf %428, %429 : vector<8x16xf32>
    %431 = math.tanh %430 : vector<8x16xf32>
    %432 = arith.mulf %427, %431 : vector<8x16xf32>
    %433 = vector.extract_strided_slice %6 {offsets = [16, 0], sizes = [8, 1], strides = [1, 1]} : vector<72x1xf32> to vector<8x1xf32>
    %cst_66 = arith.constant 0.000000e+00 : f32
    %434 = vector.broadcast %cst_66 : f32 to vector<8x1xf32>
    %435 = arith.cmpf ogt, %433, %434 : vector<8x1xf32>
    %436 = vector.shape_cast %435 : vector<8x1xi1> to vector<8x1xi1>
    %437 = vector.broadcast %436 : vector<8x1xi1> to vector<8x16xi1>
    %438 = arith.select %437, %432, %376 : vector<8x16xi1>, vector<8x16xf32>
    %cst_67 = arith.constant 0.000000e+00 : f32
    %439 = vector.broadcast %cst_67 : f32 to vector<8x1xf32>
    %440 = arith.cmpf ogt, %433, %439 : vector<8x1xf32>
    %441 = vector.shape_cast %440 : vector<8x1xi1> to vector<8x1xi1>
    %442 = vector.broadcast %441 : vector<8x1xi1> to vector<8x16xi1>
    %443 = arith.select %442, %430, %381 : vector<8x16xi1>, vector<8x16xf32>
    %444 = vector.extract_strided_slice %5 {offsets = [56, 0], sizes = [8, 64], strides = [1, 1]} : vector<72x128xf32> to vector<8x64xf32>
    %445 = arith.truncf %407 : vector<8x16xf32> to vector<8x16xbf16>
    %cst_68 = arith.constant dense<0.000000e+00> : vector<8x64xf32>
    %446 = tpu.matmul %445, %7, %cst_68 {dimension_numbers = #tpu.dot_dimension_numbers<[1], [0], [0], [1], [0, 0, 1, 1], [], []>} : vector<8x16xbf16>, vector<16x64xbf16>, vector<8x64xf32> -> vector<8x64xf32>
    %447 = arith.addf %444, %446 : vector<8x64xf32>
    %448 = vector.extract_strided_slice %447 {offsets = [0, 0], sizes = [8, 48], strides = [1, 1]} : vector<8x64xf32> to vector<8x48xf32>
    %449 = arith.negf %448 : vector<8x48xf32>
    %450 = math.exp %449 : vector<8x48xf32>
    %cst_69 = arith.constant 1.000000e+00 : f32
    %451 = vector.broadcast %cst_69 : f32 to vector<8x48xf32>
    %452 = arith.addf %451, %450 : vector<8x48xf32>
    %453 = arith.divf %451, %452 : vector<8x48xf32>
    %454 = vector.extract_strided_slice %447 {offsets = [0, 48], sizes = [8, 16], strides = [1, 1]} : vector<8x64xf32> to vector<8x16xf32>
    %455 = math.tanh %454 : vector<8x16xf32>
    %456 = vector.extract_strided_slice %453 {offsets = [0, 0], sizes = [8, 16], strides = [1, 1]} : vector<8x48xf32> to vector<8x16xf32>
    %457 = vector.extract_strided_slice %453 {offsets = [0, 16], sizes = [8, 16], strides = [1, 1]} : vector<8x48xf32> to vector<8x16xf32>
    %458 = vector.extract_strided_slice %453 {offsets = [0, 32], sizes = [8, 16], strides = [1, 1]} : vector<8x48xf32> to vector<8x16xf32>
    %459 = arith.mulf %457, %412 : vector<8x16xf32>
    %460 = arith.mulf %456, %455 : vector<8x16xf32>
    %461 = arith.addf %459, %460 : vector<8x16xf32>
    %462 = math.tanh %461 : vector<8x16xf32>
    %463 = arith.mulf %458, %462 : vector<8x16xf32>
    %464 = vector.extract_strided_slice %6 {offsets = [56, 0], sizes = [8, 1], strides = [1, 1]} : vector<72x1xf32> to vector<8x1xf32>
    %cst_70 = arith.constant 0.000000e+00 : f32
    %465 = vector.broadcast %cst_70 : f32 to vector<8x1xf32>
    %466 = arith.cmpf ogt, %464, %465 : vector<8x1xf32>
    %467 = vector.shape_cast %466 : vector<8x1xi1> to vector<8x1xi1>
    %468 = vector.broadcast %467 : vector<8x1xi1> to vector<8x16xi1>
    %469 = arith.select %468, %463, %407 : vector<8x16xi1>, vector<8x16xf32>
    %cst_71 = arith.constant 0.000000e+00 : f32
    %470 = vector.broadcast %cst_71 : f32 to vector<8x1xf32>
    %471 = arith.cmpf ogt, %464, %470 : vector<8x1xf32>
    %472 = vector.shape_cast %471 : vector<8x1xi1> to vector<8x1xi1>
    %473 = vector.broadcast %472 : vector<8x1xi1> to vector<8x16xi1>
    %474 = arith.select %473, %461, %412 : vector<8x16xi1>, vector<8x16xf32>
    %475 = vector.extract_strided_slice %5 {offsets = [8, 64], sizes = [8, 64], strides = [1, 1]} : vector<72x128xf32> to vector<8x64xf32>
    %476 = arith.truncf %438 : vector<8x16xf32> to vector<8x16xbf16>
    %cst_72 = arith.constant dense<0.000000e+00> : vector<8x64xf32>
    %477 = tpu.matmul %476, %8, %cst_72 {dimension_numbers = #tpu.dot_dimension_numbers<[1], [0], [0], [1], [0, 0, 1, 1], [], []>} : vector<8x16xbf16>, vector<16x64xbf16>, vector<8x64xf32> -> vector<8x64xf32>
    %478 = arith.addf %475, %477 : vector<8x64xf32>
    %479 = vector.extract_strided_slice %478 {offsets = [0, 0], sizes = [8, 48], strides = [1, 1]} : vector<8x64xf32> to vector<8x48xf32>
    %480 = arith.negf %479 : vector<8x48xf32>
    %481 = math.exp %480 : vector<8x48xf32>
    %cst_73 = arith.constant 1.000000e+00 : f32
    %482 = vector.broadcast %cst_73 : f32 to vector<8x48xf32>
    %483 = arith.addf %482, %481 : vector<8x48xf32>
    %484 = arith.divf %482, %483 : vector<8x48xf32>
    %485 = vector.extract_strided_slice %478 {offsets = [0, 48], sizes = [8, 16], strides = [1, 1]} : vector<8x64xf32> to vector<8x16xf32>
    %486 = math.tanh %485 : vector<8x16xf32>
    %487 = vector.extract_strided_slice %484 {offsets = [0, 0], sizes = [8, 16], strides = [1, 1]} : vector<8x48xf32> to vector<8x16xf32>
    %488 = vector.extract_strided_slice %484 {offsets = [0, 16], sizes = [8, 16], strides = [1, 1]} : vector<8x48xf32> to vector<8x16xf32>
    %489 = vector.extract_strided_slice %484 {offsets = [0, 32], sizes = [8, 16], strides = [1, 1]} : vector<8x48xf32> to vector<8x16xf32>
    %490 = arith.mulf %488, %443 : vector<8x16xf32>
    %491 = arith.mulf %487, %486 : vector<8x16xf32>
    %492 = arith.addf %490, %491 : vector<8x16xf32>
    %493 = math.tanh %492 : vector<8x16xf32>
    %494 = arith.mulf %489, %493 : vector<8x16xf32>
    %495 = vector.extract_strided_slice %6 {offsets = [8, 0], sizes = [8, 1], strides = [1, 1]} : vector<72x1xf32> to vector<8x1xf32>
    %cst_74 = arith.constant 0.000000e+00 : f32
    %496 = vector.broadcast %cst_74 : f32 to vector<8x1xf32>
    %497 = arith.cmpf ogt, %495, %496 : vector<8x1xf32>
    %498 = vector.shape_cast %497 : vector<8x1xi1> to vector<8x1xi1>
    %499 = vector.broadcast %498 : vector<8x1xi1> to vector<8x16xi1>
    %500 = arith.select %499, %494, %438 : vector<8x16xi1>, vector<8x16xf32>
    %cst_75 = arith.constant 0.000000e+00 : f32
    %501 = vector.broadcast %cst_75 : f32 to vector<8x1xf32>
    %502 = arith.cmpf ogt, %495, %501 : vector<8x1xf32>
    %503 = vector.shape_cast %502 : vector<8x1xi1> to vector<8x1xi1>
    %504 = vector.broadcast %503 : vector<8x1xi1> to vector<8x16xi1>
    %505 = arith.select %504, %492, %443 : vector<8x16xi1>, vector<8x16xf32>
    %506 = vector.extract_strided_slice %5 {offsets = [64, 0], sizes = [8, 64], strides = [1, 1]} : vector<72x128xf32> to vector<8x64xf32>
    %507 = arith.truncf %469 : vector<8x16xf32> to vector<8x16xbf16>
    %cst_76 = arith.constant dense<0.000000e+00> : vector<8x64xf32>
    %508 = tpu.matmul %507, %7, %cst_76 {dimension_numbers = #tpu.dot_dimension_numbers<[1], [0], [0], [1], [0, 0, 1, 1], [], []>} : vector<8x16xbf16>, vector<16x64xbf16>, vector<8x64xf32> -> vector<8x64xf32>
    %509 = arith.addf %506, %508 : vector<8x64xf32>
    %510 = vector.extract_strided_slice %509 {offsets = [0, 0], sizes = [8, 48], strides = [1, 1]} : vector<8x64xf32> to vector<8x48xf32>
    %511 = arith.negf %510 : vector<8x48xf32>
    %512 = math.exp %511 : vector<8x48xf32>
    %cst_77 = arith.constant 1.000000e+00 : f32
    %513 = vector.broadcast %cst_77 : f32 to vector<8x48xf32>
    %514 = arith.addf %513, %512 : vector<8x48xf32>
    %515 = arith.divf %513, %514 : vector<8x48xf32>
    %516 = vector.extract_strided_slice %509 {offsets = [0, 48], sizes = [8, 16], strides = [1, 1]} : vector<8x64xf32> to vector<8x16xf32>
    %517 = math.tanh %516 : vector<8x16xf32>
    %518 = vector.extract_strided_slice %515 {offsets = [0, 0], sizes = [8, 16], strides = [1, 1]} : vector<8x48xf32> to vector<8x16xf32>
    %519 = vector.extract_strided_slice %515 {offsets = [0, 16], sizes = [8, 16], strides = [1, 1]} : vector<8x48xf32> to vector<8x16xf32>
    %520 = vector.extract_strided_slice %515 {offsets = [0, 32], sizes = [8, 16], strides = [1, 1]} : vector<8x48xf32> to vector<8x16xf32>
    %521 = arith.mulf %519, %474 : vector<8x16xf32>
    %522 = arith.mulf %518, %517 : vector<8x16xf32>
    %523 = arith.addf %521, %522 : vector<8x16xf32>
    %524 = math.tanh %523 : vector<8x16xf32>
    %525 = arith.mulf %520, %524 : vector<8x16xf32>
    %526 = vector.extract_strided_slice %6 {offsets = [64, 0], sizes = [8, 1], strides = [1, 1]} : vector<72x1xf32> to vector<8x1xf32>
    %cst_78 = arith.constant 0.000000e+00 : f32
    %527 = vector.broadcast %cst_78 : f32 to vector<8x1xf32>
    %528 = arith.cmpf ogt, %526, %527 : vector<8x1xf32>
    %529 = vector.shape_cast %528 : vector<8x1xi1> to vector<8x1xi1>
    %530 = vector.broadcast %529 : vector<8x1xi1> to vector<8x16xi1>
    %531 = arith.select %530, %525, %469 : vector<8x16xi1>, vector<8x16xf32>
    %532 = vector.extract_strided_slice %5 {offsets = [0, 64], sizes = [8, 64], strides = [1, 1]} : vector<72x128xf32> to vector<8x64xf32>
    %533 = arith.truncf %500 : vector<8x16xf32> to vector<8x16xbf16>
    %cst_79 = arith.constant dense<0.000000e+00> : vector<8x64xf32>
    %534 = tpu.matmul %533, %8, %cst_79 {dimension_numbers = #tpu.dot_dimension_numbers<[1], [0], [0], [1], [0, 0, 1, 1], [], []>} : vector<8x16xbf16>, vector<16x64xbf16>, vector<8x64xf32> -> vector<8x64xf32>
    %535 = arith.addf %532, %534 : vector<8x64xf32>
    %536 = vector.extract_strided_slice %535 {offsets = [0, 0], sizes = [8, 48], strides = [1, 1]} : vector<8x64xf32> to vector<8x48xf32>
    %537 = arith.negf %536 : vector<8x48xf32>
    %538 = math.exp %537 : vector<8x48xf32>
    %cst_80 = arith.constant 1.000000e+00 : f32
    %539 = vector.broadcast %cst_80 : f32 to vector<8x48xf32>
    %540 = arith.addf %539, %538 : vector<8x48xf32>
    %541 = arith.divf %539, %540 : vector<8x48xf32>
    %542 = vector.extract_strided_slice %535 {offsets = [0, 48], sizes = [8, 16], strides = [1, 1]} : vector<8x64xf32> to vector<8x16xf32>
    %543 = math.tanh %542 : vector<8x16xf32>
    %544 = vector.extract_strided_slice %541 {offsets = [0, 0], sizes = [8, 16], strides = [1, 1]} : vector<8x48xf32> to vector<8x16xf32>
    %545 = vector.extract_strided_slice %541 {offsets = [0, 16], sizes = [8, 16], strides = [1, 1]} : vector<8x48xf32> to vector<8x16xf32>
    %546 = vector.extract_strided_slice %541 {offsets = [0, 32], sizes = [8, 16], strides = [1, 1]} : vector<8x48xf32> to vector<8x16xf32>
    %547 = arith.mulf %545, %505 : vector<8x16xf32>
    %548 = arith.mulf %544, %543 : vector<8x16xf32>
    %549 = arith.addf %547, %548 : vector<8x16xf32>
    %550 = math.tanh %549 : vector<8x16xf32>
    %551 = arith.mulf %546, %550 : vector<8x16xf32>
    %552 = vector.extract_strided_slice %6 {offsets = [0, 0], sizes = [8, 1], strides = [1, 1]} : vector<72x1xf32> to vector<8x1xf32>
    %cst_81 = arith.constant 0.000000e+00 : f32
    %553 = vector.broadcast %cst_81 : f32 to vector<8x1xf32>
    %554 = arith.cmpf ogt, %552, %553 : vector<8x1xf32>
    %555 = vector.shape_cast %554 : vector<8x1xi1> to vector<8x1xi1>
    %556 = vector.broadcast %555 : vector<8x1xi1> to vector<8x16xi1>
    %557 = arith.select %556, %551, %500 : vector<8x16xi1>, vector<8x16xf32>
    %c0_82 = arith.constant 0 : index
    %c0_83 = arith.constant 0 : index
    %558 = vector.load %arg7[%c0_82, %c0_83] : memref<8x32xf32, #tpu.memory_space<vmem>>, vector<8x16xf32>
    tpu.vector_store %arg7[%c0_82, %c0_83], %531 {strides = array<i32>} : memref<8x32xf32, #tpu.memory_space<vmem>>, vector<8x16xf32>,
    %c0_84 = arith.constant 0 : index
    %c16 = arith.constant 16 : index
    %559 = vector.load %arg7[%c0_84, %c16] : memref<8x32xf32, #tpu.memory_space<vmem>>, vector<8x16xf32>
    tpu.vector_store %arg7[%c0_84, %c16], %557 {strides = array<i32>} : memref<8x32xf32, #tpu.memory_space<vmem>>, vector<8x16xf32>,
    return
  }
  func.func @transform_0(%arg0: i32) -> (i32, i32) {
    %c0_i32 = arith.constant 0 : i32
    %c0_i32_0 = arith.constant 0 : i32
    return %arg0, %c0_i32 : i32, i32
  }
  func.func @transform_1(%arg0: i32) -> (i32, i32) {
    %c0_i32 = arith.constant 0 : i32
    %c0_i32_0 = arith.constant 0 : i32
    return %arg0, %c0_i32 : i32, i32
  }
  func.func @transform_2(%arg0: i32) -> (i32, i32) {
    %c0_i32 = arith.constant 0 : i32
    %c0_i32_0 = arith.constant 0 : i32
    %c0_i32_1 = arith.constant 0 : i32
    return %c0_i32, %c0_i32_0 : i32, i32
  }
  func.func @transform_3(%arg0: i32) -> (i32, i32) {
    %c0_i32 = arith.constant 0 : i32
    %c0_i32_0 = arith.constant 0 : i32
    %c0_i32_1 = arith.constant 0 : i32
    return %c0_i32, %c0_i32_0 : i32, i32
  }
  func.func @transform_4(%arg0: i32) -> (i32, i32) {
    %c0_i32 = arith.constant 0 : i32
    %c0_i32_0 = arith.constant 0 : i32
    %c0_i32_1 = arith.constant 0 : i32
    return %c0_i32, %c0_i32_0 : i32, i32
  }
  func.func @transform_5(%arg0: i32) -> (i32, i32) {
    %c0_i32 = arith.constant 0 : i32
    %c0_i32_0 = arith.constant 0 : i32
    %c0_i32_1 = arith.constant 0 : i32
    return %c0_i32, %c0_i32_0 : i32, i32
  }
  func.func @transform_6(%arg0: i32) -> (i32, i32) {
    %c0_i32 = arith.constant 0 : i32
    %c0_i32_0 = arith.constant 0 : i32
    return %arg0, %c0_i32 : i32, i32
  }
}

</mosaic_0001>

<llo_original>
// kernel: _embed_and_encode.1
$region0: #{_embed_and_encode.1}
  #allocation0 [shape = 'u32[]', space=smem, size = 0x4, offset = 0x4, fixed_abs, tag = 'smem constant byte address 0x4 - core index']
  #allocation1 [shape = 'u32[72,128]{1,0:T(1,128)}', space=vmem, size = 0x9000, scoped, tag = 'internal scratch']
  %s0 = inlined_call_operand.vmem [shape: bf16[72,32], index: 0, kind: input, shape index: {}]
  %s1 = inlined_call_operand.vmem [shape: f32[72,1], index: 1, kind: input, shape index: {}]
  %s2 = inlined_call_operand.vmem [shape: bf16[32,128], index: 2, kind: input, shape index: {}]
  %s3 = inlined_call_operand.vmem [shape: bf16[16,64], index: 3, kind: input, shape index: {}]
  %s4 = inlined_call_operand.vmem [shape: bf16[16,64], index: 4, kind: input, shape index: {}]
  %s5 = inlined_call_operand.vmem [shape: f32[1,128], index: 5, kind: input, shape index: {}]
  %s6 = inlined_call_operand.hbm [shape: f32[8,32], index: 6, kind: output, shape index: {}]
  %s7 = sld [smem:[#allocation0]]
  $region34: #{_embed_and_encode.1} parent=0
    _
  %s9 = ssub.s32 1, %s7
  %s10 = scalar_select 0, %s9, %s7
  $region1: #{_embed_and_encode.1} parent=0
    #allocation2 [shape = 'u8[4096]{0}', space=vmem, size = 0x1000, scoped, tag = 'output window, operand 0, single buffered']
    #allocation3 [shape = 's32[1]{0}', space=sflag, size = 0x4, scoped, tag = 'scoped memory for _embed_and_encode.1']
    %11 = vsyncpa [#allocation3], 0
    // Predicated region
    $region2: #{_embed_and_encode.1} parent=1 // pred_check
      _
    $region3: #{_embed_and_encode.1} parent=1 // pred_check_branch
      %13 = sbr.rel (0) target = $region5
    $region4: #{_embed_and_encode.1} parent=1 // pred_region
      _
    $region5: #{_embed_and_encode.1} parent=1 // pred_fallthru
      _
    // Predicated region
    $region6: #{_embed_and_encode.1} parent=1 // pred_check
      _
    $region7: #{_embed_and_encode.1} parent=1 // pred_check_branch
      %15 = sbr.rel (0) target = $region9
    $region8: #{_embed_and_encode.1} parent=1 // pred_region
      _
    $region9: #{_embed_and_encode.1} parent=1 // pred_fallthru
      _
    // Predicated region
    $region10: #{_embed_and_encode.1} parent=1 // pred_check
      _
    $region11: #{_embed_and_encode.1} parent=1 // pred_check_branch
      %17 = sbr.rel (0) target = $region13
    $region12: #{_embed_and_encode.1} parent=1 // pred_region
      _
    $region13: #{_embed_and_encode.1} parent=1 // pred_fallthru
      _
    // Predicated region
    $region14: #{_embed_and_encode.1} parent=1 // pred_check
      _
    $region15: #{_embed_and_encode.1} parent=1 // pred_check_branch
      %19 = sbr.rel (0) target = $region17
    $region16: #{_embed_and_encode.1} parent=1 // pred_region
      _
    $region17: #{_embed_and_encode.1} parent=1 // pred_fallthru
      _
    // Predicated region
    $region18: #{_embed_and_encode.1} parent=1 // pred_check
      _
    $region19: #{_embed_and_encode.1} parent=1 // pred_check_branch
      %21 = sbr.rel (0) target = $region21
    $region20: #{_embed_and_encode.1} parent=1 // pred_region
      _
    $region21: #{_embed_and_encode.1} parent=1 // pred_fallthru
      _
    // Predicated region
    $region22: #{_embed_and_encode.1} parent=1 // pred_check
      _
    $region23: #{_embed_and_encode.1} parent=1 // pred_check_branch
      %23 = sbr.rel (0) target = $region25
    $region24: #{_embed_and_encode.1} parent=1 // pred_region
      _
    $region25: #{_embed_and_encode.1} parent=1 // pred_fallthru
      _
    %v25 = vld [vmem:[%s0] sm:$0xf]
    %v26 = vld [vmem:[%s0 + $0x4] sm:$0xf]
    %v27 = vld [vmem:[%s0 + $0x8] sm:$0xf]
    %v28 = vld [vmem:[%s0 + $0xc] sm:$0xf]
    %v29 = vld [vmem:[%s0 + $0x10] sm:$0xf]
    %v30 = vld [vmem:[%s0 + $0x14] sm:$0xf]
    %v31 = vld [vmem:[%s0 + $0x18] sm:$0xf]
    %v32 = vld [vmem:[%s0 + $0x1c] sm:$0xf]
    %v33 = vld [vmem:[%s0 + $0x20] sm:$0xf]
    %v34 = vld [vmem:[%s2] sm:$0xf]
    %v35 = vld [vmem:[%s2 + $0x4] sm:$0xf]
    %v36 = vld [vmem:[%s2 + $0x8] sm:$0xf]
    %v37 = vld [vmem:[%s2 + $0xc] sm:$0xf]
    %v38 = vld [vmem:[%s5] sm:$0x1]
    %v40 = vperm.slane %v38, 0
    %v51 = vunpack.c.l.b16 %v25
    %v52 = vunpack.c.l.b16 %v26
    %v53 = vunpack.c.l.b16 %v27
    %v54 = vunpack.c.l.b16 %v28
    %v55 = vunpack.c.l.b16 %v29
    %v56 = vunpack.c.l.b16 %v30
    %v57 = vunpack.c.l.b16 %v31
    %v58 = vunpack.c.l.b16 %v32
    %v59 = vunpack.c.l.b16 %v33
    %v60 = vpack.c.b16 %v52, %v51
    %v61 = vpack.c.b16 %v54, %v53
    %v62 = vpack.c.b16 %v56, %v55
    %v63 = vpack.c.b16 %v58, %v57
    %v64 = vpack.c.b16 %v59, %v59
    %v69 = vunpack.c.l.b16 %v34
    %v70 = vunpack.c.l.b16 %v35
    %v71 = vunpack.c.l.b16 %v36
    %v72 = vunpack.c.l.b16 %v37
    %v73 = vpack.c.b16 %v70, %v69
    %v74 = vpack.c.b16 %v72, %v71
    %vm77 = vcmask 261120
    %v79 = vsel %vm77, %v60, 0
    %v82 = vsel %vm77, %v61, 0
    %v85 = vsel %vm77, %v62, 0
    %v88 = vsel %vm77, %v63, 0
    %v91 = vsel %vm77, %v64, 0
    %93 = vmatpush.bf16.msra.mxu0 0
    %94 = vmatpush.bf16.msra.mxu0 0
    %95 = vmatpush.bf16.msra.mxu0 0
    %96 = vmatpush.bf16.msra.mxu0 0
    %97 = vmatpush.bf16.msra.mxu0 0
    %98 = vmatpush.bf16.msra.mxu0 0
    %99 = vmatpush.bf16.msra.mxu0 %v74
    %100 = vmatpush.bf16.msra.mxu0 %v73
    %101 = vmatmul.bf16.gmra.mxu0 %v79
    %v102 = vpop.f32.mrf.mxu0
    %v103 = vadd.f32 %v40, %v102
    %v104 = vpop.f32.mrf.mxu0
    %v105 = vadd.f32 %v40, %v104
    %106 = vmatmul.bf16.gmra.mxu0 %v82
    %v107 = vpop.f32.mrf.mxu0
    %v108 = vadd.f32 %v40, %v107
    %v109 = vpop.f32.mrf.mxu0
    %v110 = vadd.f32 %v40, %v109
    %111 = vmatmul.bf16.gmra.mxu0 %v85
    %v112 = vpop.f32.mrf.mxu0
    %v113 = vadd.f32 %v40, %v112
    %v114 = vpop.f32.mrf.mxu0
    %v115 = vadd.f32 %v40, %v114
    %116 = vmatmul.bf16.gmra.mxu0 %v88
    %v117 = vpop.f32.mrf.mxu0
    %v118 = vadd.f32 %v40, %v117
    %v119 = vpop.f32.mrf.mxu0
    %v120 = vadd.f32 %v40, %v119
    %121 = vmatmul.bf16.gmra.mxu0 %v91
    %v122 = vpop.f32.mrf.mxu0
    %v123 = vadd.f32 %v40, %v122
    %v124 = vpop.f32.mrf.mxu0
    %125 = vdwg.mxu0
    %v126 = vld [vmem:[%s1] sm:$0xff]
    %v127 = vld [vmem:[%s1 + $0x8] sm:$0xff]
    %v128 = vld [vmem:[%s1 + $0x10] sm:$0xff]
    %v129 = vld [vmem:[%s1 + $0x18] sm:$0xff]
    %v130 = vld [vmem:[%s1 + $0x20] sm:$0xff]
    %v131 = vld [vmem:[%s1 + $0x28] sm:$0xff]
    %v132 = vld [vmem:[%s1 + $0x30] sm:$0xff]
    %v133 = vld [vmem:[%s1 + $0x38] sm:$0xff]
    %v134 = vld [vmem:[%s1 + $0x40] sm:$0xff]
    %v135 = vld [vmem:[%s3] sm:$0xf]
    %v136 = vld [vmem:[%s3 + $0x4] sm:$0xf]
    %v137 = vld [vmem:[%s4] sm:$0xf]
    %v138 = vld [vmem:[%s4 + $0x4] sm:$0xf]
    %v141 = vunpack.c.l.b16 %v135
    %v142 = vunpack.c.l.b16 %v136
    %v143 = vpack.c.b16 %v142, %v141
    %vm145 = vcmask 130048
    %v147 = vsel %vm145, 0, 0
    %149 = vmatpush.bf16.msra.mxu0 0
    %150 = vmatpush.bf16.msra.mxu0 0
    %151 = vmatpush.bf16.msra.mxu0 0
    %152 = vmatpush.bf16.msra.mxu0 0
    %153 = vmatpush.bf16.msra.mxu0 0
    %154 = vmatpush.bf16.msra.mxu0 0
    %155 = vmatpush.bf16.msra.mxu0 0
    %156 = vmatpush.bf16.msra.mxu0 %v143
    %157 = vmatmul.bf16.gmra.mxu0 %v147
    %v158 = vpop.f32.mrf.mxu0
    %v159 = vadd.f32 0.0, %v158
    %v160 = vpop.f32.mrf.mxu0
    %161 = vdwg.mxu0
    %v162 = vadd.f32 %v103, %v159
    %v163 = vxor.u32 %v162, 2147483648
    %v164 = vmul.f32 %v163, 1.442695
    %v165 = vpow.pop %v164
    %v166 = vadd.f32 %v165, 1.0
    %v167 = vrcp.pop %v166
    %v168 = vmul.f32 %v166, %v167
    %v169 = vsub.f32 1.0, %v168
    %v170 = vmul.f32 %v167, %v169
    %v171 = vadd.f32 %v167, %v170
    %vm172 = vweird.f32 %v166
    %vm173 = vweird.f32 %v167
    %vm174 = vmor %vm172, %vm173
    %v175 = vsel %vm174, %v167, %v171
    %v176 = vand.u32 2147483647, %v166
    %vm177 = vcmp.eq.f32.partialorder %v176, 8.507059e+37
    %v178 = vand.u32 %v166, 2147483648
    %v179 = vor.u32 1.1754944e-38, %v178
    %v180 = vsel %vm177, %v179, %v175
    %v181 = vmul.f32 1.0, %v180
    %v182 = vtanh.pop %v162
    %v183 = vmul.f32 %v181, 0.0
    %185 = vrot.lane.b32.xlu0 %v182, 80
    %v186 = vpop.permute.xlu0 %185
    %v188 = vmul.f32 %v181, %v186
    %190 = vrot.lane.b32.xlu0 %v188, 16
    %v191 = vpop.permute.xlu0 %190
    %v193 = vadd.f32 %v183, %v191
    %v194 = vtanh.pop %v193
    %196 = vrot.lane.b32.xlu0 %v194, 16
    %v197 = vpop.permute.xlu0 %196
    %v199 = vmul.f32 %v181, %v197
    %vm200 = vcmp.gt.f32.partialorder %v126, 0.0
    %v201 = vsel %vm200, 1, 0
    %202 = vset.pattern.permute.xlu0 0
    %203 = vperm.xlu0 %202, %v201
    %v204 = vpop.permute.xlu0 %203
    %vm205 = vcmp.eq.s32.totalorder %v204, 1
    %v206 = vsel %vm205, %v199, 0.0
    %v207 = vsel %vm205, %v193, 0.0
    %v210 = vunpack.c.l.b16 %v137
    %v211 = vunpack.c.l.b16 %v138
    %v212 = vpack.c.b16 %v211, %v210
    %214 = vmatpush.bf16.msra.mxu0 0
    %215 = vmatpush.bf16.msra.mxu0 0
    %216 = vmatpush.bf16.msra.mxu0 0
    %217 = vmatpush.bf16.msra.mxu0 0
    %218 = vmatpush.bf16.msra.mxu0 0
    %219 = vmatpush.bf16.msra.mxu0 0
    %220 = vmatpush.bf16.msra.mxu0 0
    %221 = vmatpush.bf16.msra.mxu0 %v212
    %222 = vmatmul.bf16.gmra.mxu0 %v147
    %v223 = vpop.f32.mrf.mxu0
    %v224 = vadd.f32 0.0, %v223
    %v225 = vpop.f32.mrf.mxu0
    %226 = vdwg.mxu0
    %228 = vrot.lane.b32.xlu0 %v224, 64
    %v229 = vpop.permute.xlu0 %228
    %v231 = vadd.f32 %v123, %v229
    %v232 = vxor.u32 %v231, 2147483648
    %v233 = vmul.f32 %v232, 1.442695
    %v234 = vpow.pop %v233
    %v235 = vadd.f32 %v234, 1.0
    %v236 = vrcp.pop %v235
    %v237 = vmul.f32 %v235, %v236
    %v238 = vsub.f32 1.0, %v237
    %v239 = vmul.f32 %v236, %v238
    %v240 = vadd.f32 %v236, %v239
    %vm241 = vweird.f32 %v235
    %vm242 = vweird.f32 %v236
    %vm243 = vmor %vm241, %vm242
    %v244 = vsel %vm243, %v236, %v240
    %v245 = vand.u32 2147483647, %v235
    %vm246 = vcmp.eq.f32.partialorder %v245, 8.507059e+37
    %v247 = vand.u32 %v235, 2147483648
    %v248 = vor.u32 1.1754944e-38, %v247
    %v249 = vsel %vm246, %v248, %v244
    %v250 = vmul.f32 1.0, %v249
    %v251 = vtanh.pop %v231
    %v252 = vmul.f32 %v250, 0.0
    %254 = vrot.lane.b32.xlu0 %v251, 80
    %v255 = vpop.permute.xlu0 %254
    %v257 = vmul.f32 %v250, %v255
    %259 = vrot.lane.b32.xlu0 %v257, 16
    %v260 = vpop.permute.xlu0 %259
    %v262 = vadd.f32 %v252, %v260
    %v263 = vtanh.pop %v262
    %265 = vrot.lane.b32.xlu0 %v263, 16
    %v266 = vpop.permute.xlu0 %265
    %v268 = vmul.f32 %v250, %v266
    %vm269 = vcmp.gt.f32.partialorder %v134, 0.0
    %v270 = vsel %vm269, 1, 0
    %271 = vset.pattern.permute.xlu0 0
    %272 = vperm.xlu0 %271, %v270
    %v273 = vpop.permute.xlu0 %272
    %vm274 = vcmp.eq.s32.totalorder %v273, 1
    %v275 = vsel %vm274, %v268, 0.0
    %v276 = vsel %vm274, %v262, 0.0
    %v277 = vpack.c.bf16 %v206, %v206
    %279 = vrot.lane.b32.xlu0 %v277, 96
    %v280 = vpop.permute.xlu0 %279
    %v282 = vsel %vm145, %v280, 0
    %284 = vmatpush.bf16.msra.mxu0 0
    %285 = vmatpush.bf16.msra.mxu0 0
    %286 = vmatpush.bf16.msra.mxu0 0
    %287 = vmatpush.bf16.msra.mxu0 0
    %288 = vmatpush.bf16.msra.mxu0 0
    %289 = vmatpush.bf16.msra.mxu0 0
    %290 = vmatpush.bf16.msra.mxu0 0
    %291 = vmatpush.bf16.msra.mxu0 %v143
    %292 = vmatmul.bf16.gmra.mxu0 %v282
    %v293 = vpop.f32.mrf.mxu0
    %v294 = vadd.f32 0.0, %v293
    %v295 = vpop.f32.mrf.mxu0
    %296 = vdwg.mxu0
    %v297 = vadd.f32 %v105, %v294
    %v298 = vxor.u32 %v297, 2147483648
    %v299 = vmul.f32 %v298, 1.442695
    %v300 = vpow.pop %v299
    %v301 = vadd.f32 %v300, 1.0
    %v302 = vrcp.pop %v301
    %v303 = vmul.f32 %v301, %v302
    %v304 = vsub.f32 1.0, %v303
    %v305 = vmul.f32 %v302, %v304
    %v306 = vadd.f32 %v302, %v305
    %vm307 = vweird.f32 %v301
    %vm308 = vweird.f32 %v302
    %vm309 = vmor %vm307, %vm308
    %v310 = vsel %vm309, %v302, %v306
    %v311 = vand.u32 2147483647, %v301
    %vm312 = vcmp.eq.f32.partialorder %v311, 8.507059e+37
    %v313 = vand.u32 %v301, 2147483648
    %v314 = vor.u32 1.1754944e-38, %v313
    %v315 = vsel %vm312, %v314, %v310
    %v316 = vmul.f32 1.0, %v315
    %v317 = vtanh.pop %v297
    %v318 = vmul.f32 %v316, %v207
    %320 = vrot.lane.b32.xlu0 %v317, 80
    %v321 = vpop.permute.xlu0 %320
    %v323 = vmul.f32 %v316, %v321
    %325 = vrot.lane.b32.xlu0 %v323, 16
    %v326 = vpop.permute.xlu0 %325
    %v328 = vadd.f32 %v318, %v326
    %v329 = vtanh.pop %v328
    %331 = vrot.lane.b32.xlu0 %v329, 16
    %v332 = vpop.permute.xlu0 %331
    %v334 = vmul.f32 %v316, %v332
    %vm335 = vcmp.gt.f32.partialorder %v127, 0.0
    %v336 = vsel %vm335, 1, 0
    %337 = vset.pattern.permute.xlu0 0
    %338 = vperm.xlu0 %337, %v336
    %v339 = vpop.permute.xlu0 %338
    %vm340 = vcmp.eq.s32.totalorder %v339, 1
    %v341 = vsel %vm340, %v334, %v206
    %v342 = vsel %vm340, %v328, %v207
    %v343 = vpack.c.bf16 %v275, %v275
    %345 = vrot.lane.b32.xlu0 %v343, 32
    %v346 = vpop.permute.xlu0 %345
    %v348 = vsel %vm145, %v346, 0
    %350 = vmatpush.bf16.msra.mxu0 0
    %351 = vmatpush.bf16.msra.mxu0 0
    %352 = vmatpush.bf16.msra.mxu0 0
    %353 = vmatpush.bf16.msra.mxu0 0
    %354 = vmatpush.bf16.msra.mxu0 0
    %355 = vmatpush.bf16.msra.mxu0 0
    %356 = vmatpush.bf16.msra.mxu0 0
    %357 = vmatpush.bf16.msra.mxu0 %v212
    %358 = vmatmul.bf16.gmra.mxu0 %v348
    %v359 = vpop.f32.mrf.mxu0
    %v360 = vadd.f32 0.0, %v359
    %v361 = vpop.f32.mrf.mxu0
    %362 = vdwg.mxu0
    %364 = vrot.lane.b32.xlu0 %v360, 64
    %v365 = vpop.permute.xlu0 %364
    %v367 = vadd.f32 %v120, %v365
    %v368 = vxor.u32 %v367, 2147483648
    %v369 = vmul.f32 %v368, 1.442695
    %v370 = vpow.pop %v369
    %v371 = vadd.f32 %v370, 1.0
    %v372 = vrcp.pop %v371
    %v373 = vmul.f32 %v371, %v372
    %v374 = vsub.f32 1.0, %v373
    %v375 = vmul.f32 %v372, %v374
    %v376 = vadd.f32 %v372, %v375
    %vm377 = vweird.f32 %v371
    %vm378 = vweird.f32 %v372
    %vm379 = vmor %vm377, %vm378
    %v380 = vsel %vm379, %v372, %v376
    %v381 = vand.u32 2147483647, %v371
    %vm382 = vcmp.eq.f32.partialorder %v381, 8.507059e+37
    %v383 = vand.u32 %v371, 2147483648
    %v384 = vor.u32 1.1754944e-38, %v383
    %v385 = vsel %vm382, %v384, %v380
    %v386 = vmul.f32 1.0, %v385
    %v387 = vtanh.pop %v367
    %v388 = vmul.f32 %v386, %v276
    %390 = vrot.lane.b32.xlu0 %v387, 80
    %v391 = vpop.permute.xlu0 %390
    %v393 = vmul.f32 %v386, %v391
    %395 = vrot.lane.b32.xlu0 %v393, 16
    %v396 = vpop.permute.xlu0 %395
    %v398 = vadd.f32 %v388, %v396
    %v399 = vtanh.pop %v398
    %401 = vrot.lane.b32.xlu0 %v399, 16
    %v402 = vpop.permute.xlu0 %401
    %v404 = vmul.f32 %v386, %v402
    %vm405 = vcmp.gt.f32.partialorder %v133, 0.0
    %v406 = vsel %vm405, 1, 0
    %407 = vset.pattern.permute.xlu0 0
    %408 = vperm.xlu0 %407, %v406
    %v409 = vpop.permute.xlu0 %408
    %vm410 = vcmp.eq.s32.totalorder %v409, 1
    %v411 = vsel %vm410, %v404, %v275
    %v412 = vsel %vm410, %v398, %v276
    %v413 = vpack.c.bf16 %v341, %v341
    %415 = vrot.lane.b32.xlu0 %v413, 96
    %v416 = vpop.permute.xlu0 %415
    %v418 = vsel %vm145, %v416, 0
    %420 = vmatpush.bf16.msra.mxu0 0
    %421 = vmatpush.bf16.msra.mxu0 0
    %422 = vmatpush.bf16.msra.mxu0 0
    %423 = vmatpush.bf16.msra.mxu0 0
    %424 = vmatpush.bf16.msra.mxu0 0
    %425 = vmatpush.bf16.msra.mxu0 0
    %426 = vmatpush.bf16.msra.mxu0 0
    %427 = vmatpush.bf16.msra.mxu0 %v143
    %428 = vmatmul.bf16.gmra.mxu0 %v418
    %v429 = vpop.f32.mrf.mxu0
    %v430 = vadd.f32 0.0, %v429
    %v431 = vpop.f32.mrf.mxu0
    %432 = vdwg.mxu0
    %v433 = vadd.f32 %v108, %v430
    %v434 = vxor.u32 %v433, 2147483648
    %v435 = vmul.f32 %v434, 1.442695
    %v436 = vpow.pop %v435
    %v437 = vadd.f32 %v436, 1.0
    %v438 = vrcp.pop %v437
    %v439 = vmul.f32 %v437, %v438
    %v440 = vsub.f32 1.0, %v439
    %v441 = vmul.f32 %v438, %v440
    %v442 = vadd.f32 %v438, %v441
    %vm443 = vweird.f32 %v437
    %vm444 = vweird.f32 %v438
    %vm445 = vmor %vm443, %vm444
    %v446 = vsel %vm445, %v438, %v442
    %v447 = vand.u32 2147483647, %v437
    %vm448 = vcmp.eq.f32.partialorder %v447, 8.507059e+37
    %v449 = vand.u32 %v437, 2147483648
    %v450 = vor.u32 1.1754944e-38, %v449
    %v451 = vsel %vm448, %v450, %v446
    %v452 = vmul.f32 1.0, %v451
    %v453 = vtanh.pop %v433
    %v454 = vmul.f32 %v452, %v342
    %456 = vrot.lane.b32.xlu0 %v453, 80
    %v457 = vpop.permute.xlu0 %456
    %v459 = vmul.f32 %v452, %v457
    %461 = vrot.lane.b32.xlu0 %v459, 16
    %v462 = vpop.permute.xlu0 %461
    %v464 = vadd.f32 %v454, %v462
    %v465 = vtanh.pop %v464
    %467 = vrot.lane.b32.xlu0 %v465, 16
    %v468 = vpop.permute.xlu0 %467
    %v470 = vmul.f32 %v452, %v468
    %vm471 = vcmp.gt.f32.partialorder %v128, 0.0
    %v472 = vsel %vm471, 1, 0
    %473 = vset.pattern.permute.xlu0 0
    %474 = vperm.xlu0 %473, %v472
    %v475 = vpop.permute.xlu0 %474
    %vm476 = vcmp.eq.s32.totalorder %v475, 1
    %v477 = vsel %vm476, %v470, %v341
    %v478 = vsel %vm476, %v464, %v342
    %v479 = vpack.c.bf16 %v411, %v411
    %481 = vrot.lane.b32.xlu0 %v479, 32
    %v482 = vpop.permute.xlu0 %481
    %v484 = vsel %vm145, %v482, 0
    %486 = vmatpush.bf16.msra.mxu0 0
    %487 = vmatpush.bf16.msra.mxu0 0
    %488 = vmatpush.bf16.msra.mxu0 0
    %489 = vmatpush.bf16.msra.mxu0 0
    %490 = vmatpush.bf16.msra.mxu0 0
    %491 = vmatpush.bf16.msra.mxu0 0
    %492 = vmatpush.bf16.msra.mxu0 0
    %493 = vmatpush.bf16.msra.mxu0 %v212
    %494 = vmatmul.bf16.gmra.mxu0 %v484
    %v495 = vpop.f32.mrf.mxu0
    %v496 = vadd.f32 0.0, %v495
    %v497 = vpop.f32.mrf.mxu0
    %498 = vdwg.mxu0
    %500 = vrot.lane.b32.xlu0 %v496, 64
    %v501 = vpop.permute.xlu0 %500
    %v503 = vadd.f32 %v118, %v501
    %v504 = vxor.u32 %v503, 2147483648
    %v505 = vmul.f32 %v504, 1.442695
    %v506 = vpow.pop %v505
    %v507 = vadd.f32 %v506, 1.0
    %v508 = vrcp.pop %v507
    %v509 = vmul.f32 %v507, %v508
    %v510 = vsub.f32 1.0, %v509
    %v511 = vmul.f32 %v508, %v510
    %v512 = vadd.f32 %v508, %v511
    %vm513 = vweird.f32 %v507
    %vm514 = vweird.f32 %v508
    %vm515 = vmor %vm513, %vm514
    %v516 = vsel %vm515, %v508, %v512
    %v517 = vand.u32 2147483647, %v507
    %vm518 = vcmp.eq.f32.partialorder %v517, 8.507059e+37
    %v519 = vand.u32 %v507, 2147483648
    %v520 = vor.u32 1.1754944e-38, %v519
    %v521 = vsel %vm518, %v520, %v516
    %v522 = vmul.f32 1.0, %v521
    %v523 = vtanh.pop %v503
    %v524 = vmul.f32 %v522, %v412
    %526 = vrot.lane.b32.xlu0 %v523, 80
    %v527 = vpop.permute.xlu0 %526
    %v529 = vmul.f32 %v522, %v527
    %531 = vrot.lane.b32.xlu0 %v529, 16
    %v532 = vpop.permute.xlu0 %531
    %v534 = vadd.f32 %v524, %v532
    %v535 = vtanh.pop %v534
    %537 = vrot.lane.b32.xlu0 %v535, 16
    %v538 = vpop.permute.xlu0 %537
    %v540 = vmul.f32 %v522, %v538
    %vm541 = vcmp.gt.f32.partialorder %v132, 0.0
    %v542 = vsel %vm541, 1, 0
    %543 = vset.pattern.permute.xlu0 0
    %544 = vperm.xlu0 %543, %v542
    %v545 = vpop.permute.xlu0 %544
    %vm546 = vcmp.eq.s32.totalorder %v545, 1
    %v547 = vsel %vm546, %v540, %v411
    %v548 = vsel %vm546, %v534, %v412
    %v549 = vpack.c.bf16 %v477, %v477
    %551 = vrot.lane.b32.xlu0 %v549, 96
    %v552 = vpop.permute.xlu0 %551
    %v554 = vsel %vm145, %v552, 0
    %556 = vmatpush.bf16.msra.mxu0 0
    %557 = vmatpush.bf16.msra.mxu0 0
    %558 = vmatpush.bf16.msra.mxu0 0
    %559 = vmatpush.bf16.msra.mxu0 0
    %560 = vmatpush.bf16.msra.mxu0 0
    %561 = vmatpush.bf16.msra.mxu0 0
    %562 = vmatpush.bf16.msra.mxu0 0
    %563 = vmatpush.bf16.msra.mxu0 %v143
    %564 = vmatmul.bf16.gmra.mxu0 %v554
    %v565 = vpop.f32.mrf.mxu0
    %v566 = vadd.f32 0.0, %v565
    %v567 = vpop.f32.mrf.mxu0
    %568 = vdwg.mxu0
    %v569 = vadd.f32 %v110, %v566
    %v570 = vxor.u32 %v569, 2147483648
    %v571 = vmul.f32 %v570, 1.442695
    %v572 = vpow.pop %v571
    %v573 = vadd.f32 %v572, 1.0
    %v574 = vrcp.pop %v573
    %v575 = vmul.f32 %v573, %v574
    %v576 = vsub.f32 1.0, %v575
    %v577 = vmul.f32 %v574, %v576
    %v578 = vadd.f32 %v574, %v577
    %vm579 = vweird.f32 %v573
    %vm580 = vweird.f32 %v574
    %vm581 = vmor %vm579, %vm580
    %v582 = vsel %vm581, %v574, %v578
    %v583 = vand.u32 2147483647, %v573
    %vm584 = vcmp.eq.f32.partialorder %v583, 8.507059e+37
    %v585 = vand.u32 %v573, 2147483648
    %v586 = vor.u32 1.1754944e-38, %v585
    %v587 = vsel %vm584, %v586, %v582
    %v588 = vmul.f32 1.0, %v587
    %v589 = vtanh.pop %v569
    %v590 = vmul.f32 %v588, %v478
    %592 = vrot.lane.b32.xlu0 %v589, 80
    %v593 = vpop.permute.xlu0 %592
    %v595 = vmul.f32 %v588, %v593
    %597 = vrot.lane.b32.xlu0 %v595, 16
    %v598 = vpop.permute.xlu0 %597
    %v600 = vadd.f32 %v590, %v598
    %v601 = vtanh.pop %v600
    %603 = vrot.lane.b32.xlu0 %v601, 16
    %v604 = vpop.permute.xlu0 %603
    %v606 = vmul.f32 %v588, %v604
    %vm607 = vcmp.gt.f32.partialorder %v129, 0.0
    %v608 = vsel %vm607, 1, 0
    %609 = vset.pattern.permute.xlu0 0
    %610 = vperm.xlu0 %609, %v608
    %v611 = vpop.permute.xlu0 %610
    %vm612 = vcmp.eq.s32.totalorder %v611, 1
    %v613 = vsel %vm612, %v606, %v477
    %v614 = vsel %vm612, %v600, %v478
    %v615 = vpack.c.bf16 %v547, %v547
    %617 = vrot.lane.b32.xlu0 %v615, 32
    %v618 = vpop.permute.xlu0 %617
    %v620 = vsel %vm145, %v618, 0
    %622 = vmatpush.bf16.msra.mxu0 0
    %623 = vmatpush.bf16.msra.mxu0 0
    %624 = vmatpush.bf16.msra.mxu0 0
    %625 = vmatpush.bf16.msra.mxu0 0
    %626 = vmatpush.bf16.msra.mxu0 0
    %627 = vmatpush.bf16.msra.mxu0 0
    %628 = vmatpush.bf16.msra.mxu0 0
    %629 = vmatpush.bf16.msra.mxu0 %v212
    %630 = vmatmul.bf16.gmra.mxu0 %v620
    %v631 = vpop.f32.mrf.mxu0
    %v632 = vadd.f32 0.0, %v631
    %v633 = vpop.f32.mrf.mxu0
    %634 = vdwg.mxu0
    %636 = vrot.lane.b32.xlu0 %v632, 64
    %v637 = vpop.permute.xlu0 %636
    %v639 = vadd.f32 %v115, %v637
    %v640 = vxor.u32 %v639, 2147483648
    %v641 = vmul.f32 %v640, 1.442695
    %v642 = vpow.pop %v641
    %v643 = vadd.f32 %v642, 1.0
    %v644 = vrcp.pop %v643
    %v645 = vmul.f32 %v643, %v644
    %v646 = vsub.f32 1.0, %v645
    %v647 = vmul.f32 %v644, %v646
    %v648 = vadd.f32 %v644, %v647
    %vm649 = vweird.f32 %v643
    %vm650 = vweird.f32 %v644
    %vm651 = vmor %vm649, %vm650
    %v652 = vsel %vm651, %v644, %v648
    %v653 = vand.u32 2147483647, %v643
    %vm654 = vcmp.eq.f32.partialorder %v653, 8.507059e+37
    %v655 = vand.u32 %v643, 2147483648
    %v656 = vor.u32 1.1754944e-38, %v655
    %v657 = vsel %vm654, %v656, %v652
    %v658 = vmul.f32 1.0, %v657
    %v659 = vtanh.pop %v639
    %v660 = vmul.f32 %v658, %v548
    %662 = vrot.lane.b32.xlu0 %v659, 80
    %v663 = vpop.permute.xlu0 %662
    %v665 = vmul.f32 %v658, %v663
    %667 = vrot.lane.b32.xlu0 %v665, 16
    %v668 = vpop.permute.xlu0 %667
    %v670 = vadd.f32 %v660, %v668
    %v671 = vtanh.pop %v670
    %673 = vrot.lane.b32.xlu0 %v671, 16
    %v674 = vpop.permute.xlu0 %673
    %v676 = vmul.f32 %v658, %v674
    %vm677 = vcmp.gt.f32.partialorder %v131, 0.0
    %v678 = vsel %vm677, 1, 0
    %679 = vset.pattern.permute.xlu0 0
    %680 = vperm.xlu0 %679, %v678
    %v681 = vpop.permute.xlu0 %680
    %vm682 = vcmp.eq.s32.totalorder %v681, 1
    %v683 = vsel %vm682, %v676, %v547
    %v684 = vsel %vm682, %v670, %v548
    %v685 = vpack.c.bf16 %v613, %v613
    %687 = vrot.lane.b32.xlu0 %v685, 96
    %v688 = vpop.permute.xlu0 %687
    %v690 = vsel %vm145, %v688, 0
    %692 = vmatpush.bf16.msra.mxu0 0
    %693 = vmatpush.bf16.msra.mxu0 0
    %694 = vmatpush.bf16.msra.mxu0 0
    %695 = vmatpush.bf16.msra.mxu0 0
    %696 = vmatpush.bf16.msra.mxu0 0
    %697 = vmatpush.bf16.msra.mxu0 0
    %698 = vmatpush.bf16.msra.mxu0 0
    %699 = vmatpush.bf16.msra.mxu0 %v143
    %700 = vmatmul.bf16.gmra.mxu0 %v690
    %v701 = vpop.f32.mrf.mxu0
    %v702 = vadd.f32 0.0, %v701
    %v703 = vpop.f32.mrf.mxu0
    %704 = vdwg.mxu0
    %v705 = vadd.f32 %v113, %v702
    %v706 = vxor.u32 %v705, 2147483648
    %v707 = vmul.f32 %v706, 1.442695
    %v708 = vpow.pop %v707
    %v709 = vadd.f32 %v708, 1.0
    %v710 = vrcp.pop %v709
    %v711 = vmul.f32 %v709, %v710
    %v712 = vsub.f32 1.0, %v711
    %v713 = vmul.f32 %v710, %v712
    %v714 = vadd.f32 %v710, %v713
    %vm715 = vweird.f32 %v709
    %vm716 = vweird.f32 %v710
    %vm717 = vmor %vm715, %vm716
    %v718 = vsel %vm717, %v710, %v714
    %v719 = vand.u32 2147483647, %v709
    %vm720 = vcmp.eq.f32.partialorder %v719, 8.507059e+37
    %v721 = vand.u32 %v709, 2147483648
    %v722 = vor.u32 1.1754944e-38, %v721
    %v723 = vsel %vm720, %v722, %v718
    %v724 = vmul.f32 1.0, %v723
    %v725 = vtanh.pop %v705
    %v726 = vmul.f32 %v724, %v614
    %728 = vrot.lane.b32.xlu0 %v725, 80
    %v729 = vpop.permute.xlu0 %728
    %v731 = vmul.f32 %v724, %v729
    %733 = vrot.lane.b32.xlu0 %v731, 16
    %v734 = vpop.permute.xlu0 %733
    %v736 = vadd.f32 %v726, %v734
    %v737 = vtanh.pop %v736
    %739 = vrot.lane.b32.xlu0 %v737, 16
    %v740 = vpop.permute.xlu0 %739
    %v742 = vmul.f32 %v724, %v740
    %vm743 = vcmp.gt.f32.partialorder %v130, 0.0
    %v744 = vsel %vm743, 1, 0
    %745 = vset.pattern.permute.xlu0 0
    %746 = vperm.xlu0 %745, %v744
    %v747 = vpop.permute.xlu0 %746
    %vm748 = vcmp.eq.s32.totalorder %v747, 1
    %v749 = vsel %vm748, %v742, %v613
    %v750 = vsel %vm748, %v736, %v614
    %v751 = vpack.c.bf16 %v683, %v683
    %753 = vrot.lane.b32.xlu0 %v751, 32
    %v754 = vpop.permute.xlu0 %753
    %v756 = vsel %vm145, %v754, 0
    %758 = vmatpush.bf16.msra.mxu0 0
    %759 = vmatpush.bf16.msra.mxu0 0
    %760 = vmatpush.bf16.msra.mxu0 0
    %761 = vmatpush.bf16.msra.mxu0 0
    %762 = vmatpush.bf16.msra.mxu0 0
    %763 = vmatpush.bf16.msra.mxu0 0
    %764 = vmatpush.bf16.msra.mxu0 0
    %765 = vmatpush.bf16.msra.mxu0 %v212
    %766 = vmatmul.bf16.gmra.mxu0 %v756
    %v767 = vpop.f32.mrf.mxu0
    %v768 = vadd.f32 0.0, %v767
    %v769 = vpop.f32.mrf.mxu0
    %770 = vdwg.mxu0
    %772 = vrot.lane.b32.xlu0 %v768, 64
    %v773 = vpop.permute.xlu0 %772
    %v775 = vadd.f32 %v113, %v773
    %v776 = vxor.u32 %v775, 2147483648
    %v777 = vmul.f32 %v776, 1.442695
    %v778 = vpow.pop %v777
    %v779 = vadd.f32 %v778, 1.0
    %v780 = vrcp.pop %v779
    %v781 = vmul.f32 %v779, %v780
    %v782 = vsub.f32 1.0, %v781
    %v783 = vmul.f32 %v780, %v782
    %v784 = vadd.f32 %v780, %v783
    %vm785 = vweird.f32 %v779
    %vm786 = vweird.f32 %v780
    %vm787 = vmor %vm785, %vm786
    %v788 = vsel %vm787, %v780, %v784
    %v789 = vand.u32 2147483647, %v779
    %vm790 = vcmp.eq.f32.partialorder %v789, 8.507059e+37
    %v791 = vand.u32 %v779, 2147483648
    %v792 = vor.u32 1.1754944e-38, %v791
    %v793 = vsel %vm790, %v792, %v788
    %v794 = vmul.f32 1.0, %v793
    %v795 = vtanh.pop %v775
    %v796 = vmul.f32 %v794, %v684
    %798 = vrot.lane.b32.xlu0 %v795, 80
    %v799 = vpop.permute.xlu0 %798
    %v801 = vmul.f32 %v794, %v799
    %803 = vrot.lane.b32.xlu0 %v801, 16
    %v804 = vpop.permute.xlu0 %803
    %v806 = vadd.f32 %v796, %v804
    %v807 = vtanh.pop %v806
    %809 = vrot.lane.b32.xlu0 %v807, 16
    %v810 = vpop.permute.xlu0 %809
    %v812 = vmul.f32 %v794, %v810
    %v813 = vsel %vm748, %v812, %v683
    %v814 = vsel %vm748, %v806, %v684
    %v815 = vpack.c.bf16 %v749, %v749
    %817 = vrot.lane.b32.xlu0 %v815, 96
    %v818 = vpop.permute.xlu0 %817
    %v820 = vsel %vm145, %v818, 0
    %822 = vmatpush.bf16.msra.mxu0 0
    %823 = vmatpush.bf16.msra.mxu0 0
    %824 = vmatpush.bf16.msra.mxu0 0
    %825 = vmatpush.bf16.msra.mxu0 0
    %826 = vmatpush.bf16.msra.mxu0 0
    %827 = vmatpush.bf16.msra.mxu0 0
    %828 = vmatpush.bf16.msra.mxu0 0
    %829 = vmatpush.bf16.msra.mxu0 %v143
    %830 = vmatmul.bf16.gmra.mxu0 %v820
    %v831 = vpop.f32.mrf.mxu0
    %v832 = vadd.f32 0.0, %v831
    %v833 = vpop.f32.mrf.mxu0
    %834 = vdwg.mxu0
    %v835 = vadd.f32 %v115, %v832
    %v836 = vxor.u32 %v835, 2147483648
    %v837 = vmul.f32 %v836, 1.442695
    %v838 = vpow.pop %v837
    %v839 = vadd.f32 %v838, 1.0
    %v840 = vrcp.pop %v839
    %v841 = vmul.f32 %v839, %v840
    %v842 = vsub.f32 1.0, %v841
    %v843 = vmul.f32 %v840, %v842
    %v844 = vadd.f32 %v840, %v843
    %vm845 = vweird.f32 %v839
    %vm846 = vweird.f32 %v840
    %vm847 = vmor %vm845, %vm846
    %v848 = vsel %vm847, %v840, %v844
    %v849 = vand.u32 2147483647, %v839
    %vm850 = vcmp.eq.f32.partialorder %v849, 8.507059e+37
    %v851 = vand.u32 %v839, 2147483648
    %v852 = vor.u32 1.1754944e-38, %v851
    %v853 = vsel %vm850, %v852, %v848
    %v854 = vmul.f32 1.0, %v853
    %v855 = vtanh.pop %v835
    %v856 = vmul.f32 %v854, %v750
    %858 = vrot.lane.b32.xlu0 %v855, 80
    %v859 = vpop.permute.xlu0 %858
    %v861 = vmul.f32 %v854, %v859
    %863 = vrot.lane.b32.xlu0 %v861, 16
    %v864 = vpop.permute.xlu0 %863
    %v866 = vadd.f32 %v856, %v864
    %v867 = vtanh.pop %v866
    %869 = vrot.lane.b32.xlu0 %v867, 16
    %v870 = vpop.permute.xlu0 %869
    %v872 = vmul.f32 %v854, %v870
    %v873 = vsel %vm682, %v872, %v749
    %v874 = vsel %vm682, %v866, %v750
    %v875 = vpack.c.bf16 %v813, %v813
    %877 = vrot.lane.b32.xlu0 %v875, 32
    %v878 = vpop.permute.xlu0 %877
    %v880 = vsel %vm145, %v878, 0
    %882 = vmatpush.bf16.msra.mxu0 0
    %883 = vmatpush.bf16.msra.mxu0 0
    %884 = vmatpush.bf16.msra.mxu0 0
    %885 = vmatpush.bf16.msra.mxu0 0
    %886 = vmatpush.bf16.msra.mxu0 0
    %887 = vmatpush.bf16.msra.mxu0 0
    %888 = vmatpush.bf16.msra.mxu0 0
    %889 = vmatpush.bf16.msra.mxu0 %v212
    %890 = vmatmul.bf16.gmra.mxu0 %v880
    %v891 = vpop.f32.mrf.mxu0
    %v892 = vadd.f32 0.0, %v891
    %v893 = vpop.f32.mrf.mxu0
    %894 = vdwg.mxu0
    %896 = vrot.lane.b32.xlu0 %v892, 64
    %v897 = vpop.permute.xlu0 %896
    %v899 = vadd.f32 %v110, %v897
    %v900 = vxor.u32 %v899, 2147483648
    %v901 = vmul.f32 %v900, 1.442695
    %v902 = vpow.pop %v901
    %v903 = vadd.f32 %v902, 1.0
    %v904 = vrcp.pop %v903
    %v905 = vmul.f32 %v903, %v904
    %v906 = vsub.f32 1.0, %v905
    %v907 = vmul.f32 %v904, %v906
    %v908 = vadd.f32 %v904, %v907
    %vm909 = vweird.f32 %v903
    %vm910 = vweird.f32 %v904
    %vm911 = vmor %vm909, %vm910
    %v912 = vsel %vm911, %v904, %v908
    %v913 = vand.u32 2147483647, %v903
    %vm914 = vcmp.eq.f32.partialorder %v913, 8.507059e+37
    %v915 = vand.u32 %v903, 2147483648
    %v916 = vor.u32 1.1754944e-38, %v915
    %v917 = vsel %vm914, %v916, %v912
    %v918 = vmul.f32 1.0, %v917
    %v919 = vtanh.pop %v899
    %v920 = vmul.f32 %v918, %v814
    %922 = vrot.lane.b32.xlu0 %v919, 80
    %v923 = vpop.permute.xlu0 %922
    %v925 = vmul.f32 %v918, %v923
    %927 = vrot.lane.b32.xlu0 %v925, 16
    %v928 = vpop.permute.xlu0 %927
    %v930 = vadd.f32 %v920, %v928
    %v931 = vtanh.pop %v930
    %933 = vrot.lane.b32.xlu0 %v931, 16
    %v934 = vpop.permute.xlu0 %933
    %v936 = vmul.f32 %v918, %v934
    %v937 = vsel %vm612, %v936, %v813
    %v938 = vsel %vm612, %v930, %v814
    %v939 = vpack.c.bf16 %v873, %v873
    %941 = vrot.lane.b32.xlu0 %v939, 96
    %v942 = vpop.permute.xlu0 %941
    %v944 = vsel %vm145, %v942, 0
    %946 = vmatpush.bf16.msra.mxu0 0
    %947 = vmatpush.bf16.msra.mxu0 0
    %948 = vmatpush.bf16.msra.mxu0 0
    %949 = vmatpush.bf16.msra.mxu0 0
    %950 = vmatpush.bf16.msra.mxu0 0
    %951 = vmatpush.bf16.msra.mxu0 0
    %952 = vmatpush.bf16.msra.mxu0 0
    %953 = vmatpush.bf16.msra.mxu0 %v143
    %954 = vmatmul.bf16.gmra.mxu0 %v944
    %v955 = vpop.f32.mrf.mxu0
    %v956 = vadd.f32 0.0, %v955
    %v957 = vpop.f32.mrf.mxu0
    %958 = vdwg.mxu0
    %v959 = vadd.f32 %v118, %v956
    %v960 = vxor.u32 %v959, 2147483648
    %v961 = vmul.f32 %v960, 1.442695
    %v962 = vpow.pop %v961
    %v963 = vadd.f32 %v962, 1.0
    %v964 = vrcp.pop %v963
    %v965 = vmul.f32 %v963, %v964
    %v966 = vsub.f32 1.0, %v965
    %v967 = vmul.f32 %v964, %v966
    %v968 = vadd.f32 %v964, %v967
    %vm969 = vweird.f32 %v963
    %vm970 = vweird.f32 %v964
    %vm971 = vmor %vm969, %vm970
    %v972 = vsel %vm971, %v964, %v968
    %v973 = vand.u32 2147483647, %v963
    %vm974 = vcmp.eq.f32.partialorder %v973, 8.507059e+37
    %v975 = vand.u32 %v963, 2147483648
    %v976 = vor.u32 1.1754944e-38, %v975
    %v977 = vsel %vm974, %v976, %v972
    %v978 = vmul.f32 1.0, %v977
    %v979 = vtanh.pop %v959
    %v980 = vmul.f32 %v978, %v874
    %982 = vrot.lane.b32.xlu0 %v979, 80
    %v983 = vpop.permute.xlu0 %982
    %v985 = vmul.f32 %v978, %v983
    %987 = vrot.lane.b32.xlu0 %v985, 16
    %v988 = vpop.permute.xlu0 %987
    %v990 = vadd.f32 %v980, %v988
    %v991 = vtanh.pop %v990
    %993 = vrot.lane.b32.xlu0 %v991, 16
    %v994 = vpop.permute.xlu0 %993
    %v996 = vmul.f32 %v978, %v994
    %v997 = vsel %vm546, %v996, %v873
    %v998 = vsel %vm546, %v990, %v874
    %v999 = vpack.c.bf16 %v937, %v937
    %1001 = vrot.lane.b32.xlu0 %v999, 32
    %v1002 = vpop.permute.xlu0 %1001
    %v1004 = vsel %vm145, %v1002, 0
    %1006 = vmatpush.bf16.msra.mxu0 0
    %1007 = vmatpush.bf16.msra.mxu0 0
    %1008 = vmatpush.bf16.msra.mxu0 0
    %1009 = vmatpush.bf16.msra.mxu0 0
    %1010 = vmatpush.bf16.msra.mxu0 0
    %1011 = vmatpush.bf16.msra.mxu0 0
    %1012 = vmatpush.bf16.msra.mxu0 0
    %1013 = vmatpush.bf16.msra.mxu0 %v212
    %1014 = vmatmul.bf16.gmra.mxu0 %v1004
    %v1015 = vpop.f32.mrf.mxu0
    %v1016 = vadd.f32 0.0, %v1015
    %v1017 = vpop.f32.mrf.mxu0
    %1018 = vdwg.mxu0
    %1020 = vrot.lane.b32.xlu0 %v1016, 64
    %v1021 = vpop.permute.xlu0 %1020
    %v1023 = vadd.f32 %v108, %v1021
    %v1024 = vxor.u32 %v1023, 2147483648
    %v1025 = vmul.f32 %v1024, 1.442695
    %v1026 = vpow.pop %v1025
    %v1027 = vadd.f32 %v1026, 1.0
    %v1028 = vrcp.pop %v1027
    %v1029 = vmul.f32 %v1027, %v1028
    %v1030 = vsub.f32 1.0, %v1029
    %v1031 = vmul.f32 %v1028, %v1030
    %v1032 = vadd.f32 %v1028, %v1031
    %vm1033 = vweird.f32 %v1027
    %vm1034 = vweird.f32 %v1028
    %vm1035 = vmor %vm1033, %vm1034
    %v1036 = vsel %vm1035, %v1028, %v1032
    %v1037 = vand.u32 2147483647, %v1027
    %vm1038 = vcmp.eq.f32.partialorder %v1037, 8.507059e+37
    %v1039 = vand.u32 %v1027, 2147483648
    %v1040 = vor.u32 1.1754944e-38, %v1039
    %v1041 = vsel %vm1038, %v1040, %v1036
    %v1042 = vmul.f32 1.0, %v1041
    %v1043 = vtanh.pop %v1023
    %v1044 = vmul.f32 %v1042, %v938
    %1046 = vrot.lane.b32.xlu0 %v1043, 80
    %v1047 = vpop.permute.xlu0 %1046
    %v1049 = vmul.f32 %v1042, %v1047
    %1051 = vrot.lane.b32.xlu0 %v1049, 16
    %v1052 = vpop.permute.xlu0 %1051
    %v1054 = vadd.f32 %v1044, %v1052
    %v1055 = vtanh.pop %v1054
    %1057 = vrot.lane.b32.xlu0 %v1055, 16
    %v1058 = vpop.permute.xlu0 %1057
    %v1060 = vmul.f32 %v1042, %v1058
    %v1061 = vsel %vm476, %v1060, %v937
    %v1062 = vsel %vm476, %v1054, %v938
    %v1063 = vpack.c.bf16 %v997, %v997
    %1065 = vrot.lane.b32.xlu0 %v1063, 96
    %v1066 = vpop.permute.xlu0 %1065
    %v1068 = vsel %vm145, %v1066, 0
    %1070 = vmatpush.bf16.msra.mxu0 0
    %1071 = vmatpush.bf16.msra.mxu0 0
    %1072 = vmatpush.bf16.msra.mxu0 0
    %1073 = vmatpush.bf16.msra.mxu0 0
    %1074 = vmatpush.bf16.msra.mxu0 0
    %1075 = vmatpush.bf16.msra.mxu0 0
    %1076 = vmatpush.bf16.msra.mxu0 0
    %1077 = vmatpush.bf16.msra.mxu0 %v143
    %1078 = vmatmul.bf16.gmra.mxu0 %v1068
    %v1079 = vpop.f32.mrf.mxu0
    %v1080 = vadd.f32 0.0, %v1079
    %v1081 = vpop.f32.mrf.mxu0
    %1082 = vdwg.mxu0
    %v1083 = vadd.f32 %v120, %v1080
    %v1084 = vxor.u32 %v1083, 2147483648
    %v1085 = vmul.f32 %v1084, 1.442695
    %v1086 = vpow.pop %v1085
    %v1087 = vadd.f32 %v1086, 1.0
    %v1088 = vrcp.pop %v1087
    %v1089 = vmul.f32 %v1087, %v1088
    %v1090 = vsub.f32 1.0, %v1089
    %v1091 = vmul.f32 %v1088, %v1090
    %v1092 = vadd.f32 %v1088, %v1091
    %vm1093 = vweird.f32 %v1087
    %vm1094 = vweird.f32 %v1088
    %vm1095 = vmor %vm1093, %vm1094
    %v1096 = vsel %vm1095, %v1088, %v1092
    %v1097 = vand.u32 2147483647, %v1087
    %vm1098 = vcmp.eq.f32.partialorder %v1097, 8.507059e+37
    %v1099 = vand.u32 %v1087, 2147483648
    %v1100 = vor.u32 1.1754944e-38, %v1099
    %v1101 = vsel %vm1098, %v1100, %v1096
    %v1102 = vmul.f32 1.0, %v1101
    %v1103 = vtanh.pop %v1083
    %v1104 = vmul.f32 %v1102, %v998
    %1106 = vrot.lane.b32.xlu0 %v1103, 80
    %v1107 = vpop.permute.xlu0 %1106
    %v1109 = vmul.f32 %v1102, %v1107
    %1111 = vrot.lane.b32.xlu0 %v1109, 16
    %v1112 = vpop.permute.xlu0 %1111
    %v1114 = vadd.f32 %v1104, %v1112
    %v1115 = vtanh.pop %v1114
    %1117 = vrot.lane.b32.xlu0 %v1115, 16
    %v1118 = vpop.permute.xlu0 %1117
    %v1120 = vmul.f32 %v1102, %v1118
    %v1121 = vsel %vm410, %v1120, %v997
    %v1122 = vsel %vm410, %v1114, %v998
    %v1123 = vpack.c.bf16 %v1061, %v1061
    %1125 = vrot.lane.b32.xlu0 %v1123, 32
    %v1126 = vpop.permute.xlu0 %1125
    %v1128 = vsel %vm145, %v1126, 0
    %1130 = vmatpush.bf16.msra.mxu0 0
    %1131 = vmatpush.bf16.msra.mxu0 0
    %1132 = vmatpush.bf16.msra.mxu0 0
    %1133 = vmatpush.bf16.msra.mxu0 0
    %1134 = vmatpush.bf16.msra.mxu0 0
    %1135 = vmatpush.bf16.msra.mxu0 0
    %1136 = vmatpush.bf16.msra.mxu0 0
    %1137 = vmatpush.bf16.msra.mxu0 %v212
    %1138 = vmatmul.bf16.gmra.mxu0 %v1128
    %v1139 = vpop.f32.mrf.mxu0
    %v1140 = vadd.f32 0.0, %v1139
    %v1141 = vpop.f32.mrf.mxu0
    %1142 = vdwg.mxu0
    %1144 = vrot.lane.b32.xlu0 %v1140, 64
    %v1145 = vpop.permute.xlu0 %1144
    %v1147 = vadd.f32 %v105, %v1145
    %v1148 = vxor.u32 %v1147, 2147483648
    %v1149 = vmul.f32 %v1148, 1.442695
    %v1150 = vpow.pop %v1149
    %v1151 = vadd.f32 %v1150, 1.0
    %v1152 = vrcp.pop %v1151
    %v1153 = vmul.f32 %v1151, %v1152
    %v1154 = vsub.f32 1.0, %v1153
    %v1155 = vmul.f32 %v1152, %v1154
    %v1156 = vadd.f32 %v1152, %v1155
    %vm1157 = vweird.f32 %v1151
    %vm1158 = vweird.f32 %v1152
    %vm1159 = vmor %vm1157, %vm1158
    %v1160 = vsel %vm1159, %v1152, %v1156
    %v1161 = vand.u32 2147483647, %v1151
    %vm1162 = vcmp.eq.f32.partialorder %v1161, 8.507059e+37
    %v1163 = vand.u32 %v1151, 2147483648
    %v1164 = vor.u32 1.1754944e-38, %v1163
    %v1165 = vsel %vm1162, %v1164, %v1160
    %v1166 = vmul.f32 1.0, %v1165
    %v1167 = vtanh.pop %v1147
    %v1168 = vmul.f32 %v1166, %v1062
    %1170 = vrot.lane.b32.xlu0 %v1167, 80
    %v1171 = vpop.permute.xlu0 %1170
    %v1173 = vmul.f32 %v1166, %v1171
    %1175 = vrot.lane.b32.xlu0 %v1173, 16
    %v1176 = vpop.permute.xlu0 %1175
    %v1178 = vadd.f32 %v1168, %v1176
    %v1179 = vtanh.pop %v1178
    %1181 = vrot.lane.b32.xlu0 %v1179, 16
    %v1182 = vpop.permute.xlu0 %1181
    %v1184 = vmul.f32 %v1166, %v1182
    %v1185 = vsel %vm340, %v1184, %v1061
    %v1186 = vsel %vm340, %v1178, %v1062
    %v1187 = vpack.c.bf16 %v1121, %v1121
    %1189 = vrot.lane.b32.xlu0 %v1187, 96
    %v1190 = vpop.permute.xlu0 %1189
    %v1192 = vsel %vm145, %v1190, 0
    %1194 = vmatpush.bf16.msra.mxu0 0
    %1195 = vmatpush.bf16.msra.mxu0 0
    %1196 = vmatpush.bf16.msra.mxu0 0
    %1197 = vmatpush.bf16.msra.mxu0 0
    %1198 = vmatpush.bf16.msra.mxu0 0
    %1199 = vmatpush.bf16.msra.mxu0 0
    %1200 = vmatpush.bf16.msra.mxu0 0
    %1201 = vmatpush.bf16.msra.mxu0 %v143
    %1202 = vmatmul.bf16.gmra.mxu0 %v1192
    %v1203 = vpop.f32.mrf.mxu0
    %v1204 = vadd.f32 0.0, %v1203
    %v1205 = vpop.f32.mrf.mxu0
    %1206 = vdwg.mxu0
    %v1207 = vadd.f32 %v123, %v1204
    %v1208 = vxor.u32 %v1207, 2147483648
    %v1209 = vmul.f32 %v1208, 1.442695
    %v1210 = vpow.pop %v1209
    %v1211 = vadd.f32 %v1210, 1.0
    %v1212 = vrcp.pop %v1211
    %v1213 = vmul.f32 %v1211, %v1212
    %v1214 = vsub.f32 1.0, %v1213
    %v1215 = vmul.f32 %v1212, %v1214
    %v1216 = vadd.f32 %v1212, %v1215
    %vm1217 = vweird.f32 %v1211
    %vm1218 = vweird.f32 %v1212
    %vm1219 = vmor %vm1217, %vm1218
    %v1220 = vsel %vm1219, %v1212, %v1216
    %v1221 = vand.u32 2147483647, %v1211
    %vm1222 = vcmp.eq.f32.partialorder %v1221, 8.507059e+37
    %v1223 = vand.u32 %v1211, 2147483648
    %v1224 = vor.u32 1.1754944e-38, %v1223
    %v1225 = vsel %vm1222, %v1224, %v1220
    %v1226 = vmul.f32 1.0, %v1225
    %v1227 = vtanh.pop %v1207
    %v1228 = vmul.f32 %v1226, %v1122
    %1230 = vrot.lane.b32.xlu0 %v1227, 80
    %v1231 = vpop.permute.xlu0 %1230
    %v1233 = vmul.f32 %v1226, %v1231
    %1235 = vrot.lane.b32.xlu0 %v1233, 16
    %v1236 = vpop.permute.xlu0 %1235
    %v1238 = vadd.f32 %v1228, %v1236
    %v1239 = vtanh.pop %v1238
    %1241 = vrot.lane.b32.xlu0 %v1239, 16
    %v1242 = vpop.permute.xlu0 %1241
    %v1244 = vmul.f32 %v1226, %v1242
    %v1245 = vsel %vm274, %v1244, %v1121
    %v1246 = vpack.c.bf16 %v1185, %v1185
    %1248 = vrot.lane.b32.xlu0 %v1246, 32
    %v1249 = vpop.permute.xlu0 %1248
    %v1251 = vsel %vm145, %v1249, 0
    %1253 = vmatpush.bf16.msra.mxu0 0
    %1254 = vmatpush.bf16.msra.mxu0 0
    %1255 = vmatpush.bf16.msra.mxu0 0
    %1256 = vmatpush.bf16.msra.mxu0 0
    %1257 = vmatpush.bf16.msra.mxu0 0
    %1258 = vmatpush.bf16.msra.mxu0 0
    %1259 = vmatpush.bf16.msra.mxu0 0
    %1260 = vmatpush.bf16.msra.mxu0 %v212
    %1261 = vmatmul.bf16.gmra.mxu0 %v1251
    %v1262 = vpop.f32.mrf.mxu0
    %v1263 = vadd.f32 0.0, %v1262
    %v1264 = vpop.f32.mrf.mxu0
    %1265 = vdwg.mxu0
    %1267 = vrot.lane.b32.xlu0 %v1263, 64
    %v1268 = vpop.permute.xlu0 %1267
    %v1270 = vadd.f32 %v103, %v1268
    %v1271 = vxor.u32 %v1270, 2147483648
    %v1272 = vmul.f32 %v1271, 1.442695
    %v1273 = vpow.pop %v1272
    %v1274 = vadd.f32 %v1273, 1.0
    %v1275 = vrcp.pop %v1274
    %v1276 = vmul.f32 %v1274, %v1275
    %v1277 = vsub.f32 1.0, %v1276
    %v1278 = vmul.f32 %v1275, %v1277
    %v1279 = vadd.f32 %v1275, %v1278
    %vm1280 = vweird.f32 %v1274
    %vm1281 = vweird.f32 %v1275
    %vm1282 = vmor %vm1280, %vm1281
    %v1283 = vsel %vm1282, %v1275, %v1279
    %v1284 = vand.u32 2147483647, %v1274
    %vm1285 = vcmp.eq.f32.partialorder %v1284, 8.507059e+37
    %v1286 = vand.u32 %v1274, 2147483648
    %v1287 = vor.u32 1.1754944e-38, %v1286
    %v1288 = vsel %vm1285, %v1287, %v1283
    %v1289 = vmul.f32 1.0, %v1288
    %v1290 = vtanh.pop %v1270
    %v1291 = vmul.f32 %v1289, %v1186
    %1293 = vrot.lane.b32.xlu0 %v1290, 80
    %v1294 = vpop.permute.xlu0 %1293
    %v1296 = vmul.f32 %v1289, %v1294
    %1298 = vrot.lane.b32.xlu0 %v1296, 16
    %v1299 = vpop.permute.xlu0 %1298
    %v1301 = vadd.f32 %v1291, %v1299
    %v1302 = vtanh.pop %v1301
    %1304 = vrot.lane.b32.xlu0 %v1302, 16
    %v1305 = vpop.permute.xlu0 %1304
    %v1307 = vmul.f32 %v1289, %v1305
    %v1308 = vsel %vm205, %v1307, %v1185
    %1310 = vrot.lane.b32.xlu0 %v1245, 96
    %v1311 = vpop.permute.xlu0 %1310
    %1313 = vst.msk [vmem:[#allocation2] sm:$0xff] %vm145, %v1311
    %1315 = vrot.lane.b32.xlu0 %v1308, 48
    %v1316 = vpop.permute.xlu0 %1315
    %vm1318 = vcmask 261248
    %1319 = vst.msk [vmem:[#allocation2] sm:$0xff] %vm1318, %v1316
    // Predicated region
    $region26: #{_embed_and_encode.1} parent=1 // pred_check
      _
    $region27: #{_embed_and_encode.1} parent=1 // pred_check_branch
      %1321 = sbr.rel (0) target = $region29
    $region28: #{_embed_and_encode.1} parent=1 // pred_region
      %1323 = vsyncadd [#allocation3], 0
      %s1325 = sshll.u32 [#allocation2], 4
      %s1326 = int_to_ptr.vmem [resolvable:$true] %s1325
      %s1327 = sshll.u32 %s6, 4
      %s1328 = int_to_ptr.hbm [resolvable:$true] %s1327
      %1330 = dma.vmem_to_hbm [thread:$0]  %s1326, 128, %s1328, [#allocation3]
    $region29: #{_embed_and_encode.1} parent=1 // pred_fallthru
      _
    // Predicated region
    $region30: #{_embed_and_encode.1} parent=1 // pred_check
      _
    $region31: #{_embed_and_encode.1} parent=1 // pred_check_branch
      %1332 = sbr.rel (0) target = $region33
    $region32: #{_embed_and_encode.1} parent=1 // pred_region
      %1334 = dma.done [#allocation3], 128
    $region33: #{_embed_and_encode.1} parent=1 // pred_fallthru
      _
    %1335 = vsyncpa [#allocation3], 1

</llo_original>
